<compile_context>
chip_gen: v6e
topology: v6e:2x2x1
jax: 0.10.0
libtpu: 0.0.40
codegen_flags: <defaults>
</compile_context>

<pallas_src>
import functools

import jax
import jax.numpy as jnp
import numpy as np
from jax.experimental import pallas as pl
from jax.experimental.pallas import tpu as pltpu


# ----------------------------- Pallas kernel ------------------------------- #
def _shift_lanes(v, s):
    """out[:, p] = v[:, p + s], zero-filled where p + s falls outside [0, HW)."""
    if s == 0:
        return v
    z = jnp.zeros((v.shape[0], abs(s)), v.dtype)
    if s > 0:
        return jnp.concatenate([v[:, s:], z], axis=1)
    return jnp.concatenate([z, v[:, :s]], axis=1)


def _group_conv_kernel(H, W, x_ref, w_ref, pp_ref, ag_ref, agt_ref, o_ref):
    eps = 1e-5
    C_in, HW = x_ref.shape
    C3 = w_ref.shape[0]                 # 3 * C_half   (fused conv1 | conv3 | conv5)
    C_half = C3 // 3
    C_out = o_ref.shape[0]              # 2 * C_half
    G3 = ag_ref.shape[0]                # 3 * 16 GroupNorm groups
    cpg = C3 // G3                      # channels per GN group

    xb = x_ref[...].astype(jnp.bfloat16)                       # (C_in, HW)

    # column index of every pixel (pixels flattened row-major: p = i*W + j)
    pidx = jax.lax.broadcasted_iota(jnp.int32, (1, HW), 1)
    jj = pidx % W

    # in-VMEM im2col: 9 shifted / masked copies stacked on the sublane axis
    taps = []
    for kh in range(3):
        for kw in range(3):
            dy, dx = kh - 1, kw - 1
            t = _shift_lanes(xb, dy * W + dx)
            # the H boundary is handled by the zero fill of the shift; only the
            # wrap across image rows (W boundary) needs an explicit mask.
            if dx == -1:
                t = jnp.where(jj >= 1, t, jnp.zeros_like(t))
            elif dx == 1:
                t = jnp.where(jj <= W - 2, t, jnp.zeros_like(t))
            taps.append(t)
    patches = jnp.concatenate(taps, axis=0)                    # (9*C_in, HW) bf16

    # one fused MXU matmul for all three grouped convolutions (bf16 in, f32 acc)
    bias = pp_ref[:, 0:1]
    gamma = pp_ref[:, 1:2]
    beta = pp_ref[:, 2:3]
    y = jnp.dot(w_ref[...], patches,
                preferred_element_type=jnp.float32) + bias     # (C3, HW) f32

    # GroupNorm(16) per branch == 48 groups of `cpg` consecutive fused rows.
    # (E[x^2]-E[x]^2 in f32 is fine for O(1) activations; switch to a centered
    #  two-pass reduction if activations become very large.)
    n_elem = float(HW * cpg)
    s = jnp.sum(y, axis=1, keepdims=True)                      # (C3, 1)
    q = jnp.sum(y * y, axis=1, keepdims=True)                  # (C3, 1)
    sq = jnp.concatenate([s, q], axis=1)                       # (C3, 2)
    sq_g = jnp.dot(ag_ref[...], sq,
                   preferred_element_type=jnp.float32)         # (G3, 2) group sums
    mean_g = sq_g[:, 0:1] / n_elem
    var_g = sq_g[:, 1:2] / n_elem - mean_g * mean_g
    inv_g = jax.lax.rsqrt(var_g + eps)
    mi = jnp.concatenate([mean_g, inv_g], axis=1)              # (G3, 2)
    mi_c = jnp.dot(agt_ref[...], mi,
                   preferred_element_type=jnp.float32)         # (C3, 2) per channel
    xn = (y - mi_c[:, 0:1]) * (mi_c[:, 1:2] * gamma) + beta    # (C3, HW)

    # concat(x1, x3 + x5) along the channel (sublane) axis
    out = jnp.concatenate(
        [xn[0:C_half, :], xn[C_half:2 * C_half, :] + xn[2 * C_half:, :]],
        axis=0)                                                # (C_out, HW)

    # ECA: global average pool -> 1D conv(k=5, pad=2) over channels -> sigmoid gate
    pooled = jnp.sum(out, axis=1, keepdims=True) * (1.0 / HW)  # (C_out, 1)
    zpad = jnp.concatenate(
        [jnp.zeros((2, 1), jnp.float32), pooled, jnp.zeros((2, 1), jnp.float32)],
        axis=0)                                                # (C_out + 4, 1)
    z = jnp.zeros((C_out, 1), jnp.float32)
    for k in range(5):
        wk = pp_ref[0:C_out, 3 + k:4 + k]                      # wc[k] (splat column)
        z = z + wk * zpad[k:k + C_out, :]
    scale = 1.0 / (1.0 + jnp.exp(-z))                          # sigmoid

    o_ref[...] = out * scale                                   # lane-dense store


# ------------------------------ glue helpers -------------------------------- #
def _grouped_conv_to_dense(w, groups):
    """(C_out, C_in/groups, KH, KW) grouped weights -> dense (KH*KW*C_in, C_out)."""
    w = np.asarray(w)
    c_o, c_in_g, kh, kw = w.shape
    c_i = c_in_g * groups
    o_g = c_o // groups
    dense = np.zeros((kh, kw, c_i, c_o), np.float32)
    for g in range(groups):
        blk = np.transpose(w[g * o_g:(g + 1) * o_g], (2, 3, 1, 0))
        dense[:, :, g * c_in_g:(g + 1) * c_in_g, g * o_g:(g + 1) * o_g] = blk
    return dense.reshape(kh * kw * c_i, c_o)


def group_conv_forward(x_nchw, params):
    (w1_g, b1, w3_g, b3, w5_g, b5, g0, be0, g1, be1, g2, be2, wc) = params
    N, C_in, H, W = x_nchw.shape
    C_half = w1_g.shape[0]
    C_out = 2 * C_half
    C3 = 3 * C_half
    G = 16
    G3 = 3 * G
    cpg = C_half // G
    HW = H * W

    # ---- host-side constant prep (tiny) ----
    w1_d = _grouped_conv_to_dense(w1_g, 2)        # (C_in, C_half)   1x1 conv
    w3_d = _grouped_conv_to_dense(w3_g, 16)       # (9*C_in, C_half) 3x3 conv
    w5_d = _grouped_conv_to_dense(w5_g, 16)
    w_fused = np.zeros((9 * C_in, C3), np.float32)
    w_fused[4 * C_in:5 * C_in, 0:C_half] = w1_d   # 1x1 conv lives on the center tap
    w_fused[:, C_half:2 * C_half] = w3_d
    w_fused[:, 2 * C_half:] = w5_d
    w_t = jnp.asarray(w_fused.T, dtype=jnp.bfloat16)          # (C3, 9*C_in)

    # packed per-channel params: [bias | gamma | beta | eca_w0..4 (splat)]
    pp = np.zeros((C3, 8), np.float32)
    pp[:, 0] = np.concatenate([np.asarray(b1), np.asarray(b3), np.asarray(b5)])
    pp[:, 1] = np.concatenate([np.asarray(g0), np.asarray(g1), np.asarray(g2)])
    pp[:, 2] = np.concatenate([np.asarray(be0), np.asarray(be1), np.asarray(be2)])
    wc_np = np.asarray(wc).reshape(-1)
    for k in range(5):
        pp[:, 3 + k] = wc_np[k]
    pp = jnp.asarray(pp)

    # one-hot channel -> GN-group reduce / scatter matrices (all 3 branches fused)
    ag_np = (np.arange(C3)[None, :] // cpg ==
             np.arange(G3)[:, None]).astype(np.float32)        # (G3, C3)
    ag = jnp.asarray(ag_np)
    agt = jnp.asarray(ag_np.T)                                 # (C3, G3)

    # NCHW-native: rows = channels of one batch element, lanes = H*W pixels.
    x2d = x_nchw.reshape(N * C_in, HW)

    kernel = functools.partial(_group_conv_kernel, H, W)
    out2d = pl.pallas_call(
        kernel,
        out_shape=jax.ShapeDtypeStruct((N * C_out, HW), jnp.float32),
        grid=(N,),
        in_specs=[
            pl.BlockSpec((C_in, HW), lambda n: (n, 0)),
            pl.BlockSpec((C3, 9 * C_in), lambda n: (0, 0)),
            pl.BlockSpec((C3, 8), lambda n: (0, 0)),
            pl.BlockSpec((G3, C3), lambda n: (0, 0)),
            pl.BlockSpec((C3, G3), lambda n: (0, 0)),
        ],
        out_specs=pl.BlockSpec((C_out, HW), lambda n: (n, 0)),
        compiler_params=pltpu.CompilerParams(
            dimension_semantics=("parallel",)),    # dual-TensorCore on v7x
    )(x2d, w_t, pp, ag, agt)

    return out2d.reshape(N, C_out, H, W)           # already NCHW, no transpose


# ------------------------- pure-JAX reference check ------------------------- #
def reference_forward(x, params):
    (w1_g, b1, w3_g, b3, w5_g, b5, g0, be0, g1, be1, g2, be2, wc) = params
    hp = jax.lax.Precision.HIGHEST

    def conv(x, w, b, groups, pad):
        y = jax.lax.conv_general_dilated(
            x, w, window_strides=(1, 1), padding=[(pad, pad), (pad, pad)],
            dimension_numbers=('NCHW', 'OIHW', 'NCHW'),
            feature_group_count=groups, precision=hp)
        return y + b[None, :, None, None]

    def gn(y, gamma, beta, G=16, eps=1e-5):
        N, C, H, W = y.shape
        yg = y.reshape(N, G, C // G, H, W)
        mean = yg.mean(axis=(2, 3, 4), keepdims=True)
        var = yg.var(axis=(2, 3, 4), keepdims=True)
        yn = ((yg - mean) / jnp.sqrt(var + eps)).reshape(N, C, H, W)
        return yn * gamma[None, :, None, None] + beta[None, :, None, None]

    x1 = gn(conv(x, w1_g, b1, 2, 0), g0, be0)
    x3 = gn(conv(x, w3_g, b3, 16, 1), g1, be1)
    x5 = gn(conv(x, w5_g, b5, 16, 1), g2, be2)
    xc = jnp.concatenate([x1, x3 + x5], axis=1)
    N, C, H, W = xc.shape
    pooled = xc.mean(axis=(2, 3))
    pp = jnp.pad(pooled, ((0, 0), (2, 2)))
    z = sum(wc[k] * pp[:, k:k + C] for k in range(5))
    scale = jax.nn.sigmoid(z)[:, :, None, None]
    return xc * scale


# ----------------------------------- main ----------------------------------- #
if __name__ == "__main__":
    # channel counts must satisfy the module's group constraints (groups=2,16; GN=16)
    N, C_in, H, W = 2, 32, 16, 16
    C_out = 64
    C_half = C_out // 2

    key = jax.random.PRNGKey(0)
    keys = jax.random.split(key, 14)
    w1_g = 0.2 * jax.random.normal(keys[0], (C_half, C_in // 2, 1, 1), jnp.float32)
    b1 = 0.1 * jax.random.normal(keys[1], (C_half,), jnp.float32)
    w3_g = 0.2 * jax.random.normal(keys[2], (C_half, C_in // 16, 3, 3), jnp.float32)
    b3 = 0.1 * jax.random.normal(keys[3], (C_half,), jnp.float32)
    w5_g = 0.2 * jax.random.normal(keys[4], (C_half, C_in // 16, 3, 3), jnp.float32)
    b5 = 0.1 * jax.random.normal(keys[5], (C_half,), jnp.float32)
    g0 = 1.0 + 0.1 * jax.random.normal(keys[6], (C_half,), jnp.float32)
    be0 = 0.1 * jax.random.normal(keys[7], (C_half,), jnp.float32)
    g1 = 1.0 + 0.1 * jax.random.normal(keys[8], (C_half,), jnp.float32)
    be1 = 0.1 * jax.random.normal(keys[9], (C_half,), jnp.float32)
    g2 = 1.0 + 0.1 * jax.random.normal(keys[10], (C_half,), jnp.float32)
    be2 = 0.1 * jax.random.normal(keys[11], (C_half,), jnp.float32)
    wc = 0.3 * jax.random.normal(keys[12], (5,), jnp.float32)   # ECA Conv1d weight
    x = jax.random.normal(keys[13], (N, C_in, H, W), jnp.float32)

    params = (w1_g, b1, w3_g, b3, w5_g, b5, g0, be0, g1, be1, g2, be2, wc)

    out = jax.block_until_ready(group_conv_forward(x, params))
    ref = jax.block_until_ready(reference_forward(x, params))
    # kernel runs bf16 on the MXU (f32 accumulation); reference is f32 HIGHEST,
    # so tolerance is relaxed vs an exact-f32 comparison.
    np.testing.assert_allclose(np.asarray(out), np.asarray(ref),
                               rtol=2e-2, atol=2e-2)
    print("KERNEL_OK")
</pallas_src>

<mosaic_0001>
module attributes {stable_mosaic.version = 11 : i64} {
  func.func @_group_conv_kernel(%arg0: i32, %arg1: memref<32x256xf32, #tpu.memory_space<vmem>>, %arg2: memref<96x288xbf16, #tpu.memory_space<vmem>>, %arg3: memref<96x8xf32, #tpu.memory_space<vmem>>, %arg4: memref<48x96xf32, #tpu.memory_space<vmem>>, %arg5: memref<96x48xf32, #tpu.memory_space<vmem>>, %arg6: memref<64x256xf32, #tpu.memory_space<vmem>>) attributes {dimension_semantics = [#tpu.dimension_semantics<parallel>], iteration_bounds = array<i64: 2>, scalar_prefetch = 0 : i64, scratch_operands = 0 : i64, tpu.core_type = #tpu.core_type<tc>, window_params = [{transform_indices = @transform_0, window_bounds = array<i64: 32, 256>}, {pipeline_mode = #tpu.pipeline_mode<synchronous>, transform_indices = @transform_1, window_bounds = array<i64: 96, 288>}, {pipeline_mode = #tpu.pipeline_mode<synchronous>, transform_indices = @transform_2, window_bounds = array<i64: 96, 8>}, {pipeline_mode = #tpu.pipeline_mode<synchronous>, transform_indices = @transform_3, window_bounds = array<i64: 48, 96>}, {pipeline_mode = #tpu.pipeline_mode<synchronous>, transform_indices = @transform_4, window_bounds = array<i64: 96, 48>}, {transform_indices = @transform_5, window_bounds = array<i64: 64, 256>}]} {
    %c0 = arith.constant 0 : index
    %c0_0 = arith.constant 0 : index
    %0 = vector.load %arg1[%c0, %c0_0] : memref<32x256xf32, #tpu.memory_space<vmem>>, vector<32x256xf32>
    %1 = arith.truncf %0 : vector<32x256xf32> to vector<32x256xbf16>
    %2 = tpu.iota {dimensions = array<i32: 1>} : vector<1x256xi32>
    %c16_i32 = arith.constant 16 : i32
    %c0_i32 = arith.constant 0 : i32
    %3 = arith.cmpi eq, %c16_i32, %c0_i32 : i32
    %c1_i32 = arith.constant 1 : i32
    %4 = arith.select %3, %c1_i32, %c16_i32 : i32
    %5 = vector.broadcast %4 : i32 to vector<1x256xi32>
    %6 = arith.remsi %2, %5 : vector<1x256xi32>
    %c0_i32_1 = arith.constant 0 : i32
    %7 = vector.broadcast %c0_i32_1 : i32 to vector<1x256xi32>
    %8 = arith.cmpi ne, %6, %7 : vector<1x256xi32>
    %c0_i32_2 = arith.constant 0 : i32
    %9 = vector.broadcast %c0_i32_2 : i32 to vector<1x256xi32>
    %10 = arith.cmpi slt, %6, %9 : vector<1x256xi32>
    %c0_i32_3 = arith.constant 0 : i32
    %11 = arith.cmpi slt, %4, %c0_i32_3 : i32
    %12 = vector.broadcast %11 : i1 to vector<1x256xi1>
    %13 = vector.broadcast %12 : vector<1x256xi1> to vector<1x256xi1>
    %14 = arith.xori %10, %13 : vector<1x256xi1>
    %15 = arith.andi %14, %8 : vector<1x256xi1>
    %16 = vector.broadcast %4 : i32 to vector<1x256xi32>
    %17 = arith.addi %6, %16 : vector<1x256xi32>
    %18 = arith.select %15, %17, %6 : vector<1x256xi1>, vector<1x256xi32>
    %cst = arith.constant 0.000000e+00 : bf16
    %19 = vector.broadcast %cst : bf16 to vector<32x17xbf16>
    %20 = vector.extract_strided_slice %1 {offsets = [0, 0], sizes = [32, 239], strides = [1, 1]} : vector<32x256xbf16> to vector<32x239xbf16>
    %21 = tpu.concatenate %19, %20 in 1 : vector<32x17xbf16>, vector<32x239xbf16> -> vector<32x256xbf16>
    %c1_i32_4 = arith.constant 1 : i32
    %22 = vector.broadcast %c1_i32_4 : i32 to vector<1x256xi32>
    %23 = arith.cmpi sge, %18, %22 : vector<1x256xi32>
    %cst_5 = arith.constant 0.000000e+00 : bf16
    %24 = vector.broadcast %cst_5 : bf16 to vector<32x256xbf16>
    %25 = vector.shape_cast %23 : vector<1x256xi1> to vector<1x256xi1>
    %26 = vector.broadcast %25 : vector<1x256xi1> to vector<32x256xi1>
    %27 = arith.select %26, %21, %24 : vector<32x256xi1>, vector<32x256xbf16>
    %cst_6 = arith.constant 0.000000e+00 : bf16
    %28 = vector.broadcast %cst_6 : bf16 to vector<32x16xbf16>
    %29 = vector.extract_strided_slice %1 {offsets = [0, 0], sizes = [32, 240], strides = [1, 1]} : vector<32x256xbf16> to vector<32x240xbf16>
    %30 = tpu.concatenate %28, %29 in 1 : vector<32x16xbf16>, vector<32x240xbf16> -> vector<32x256xbf16>
    %cst_7 = arith.constant 0.000000e+00 : bf16
    %31 = vector.broadcast %cst_7 : bf16 to vector<32x15xbf16>
    %32 = vector.extract_strided_slice %1 {offsets = [0, 0], sizes = [32, 241], strides = [1, 1]} : vector<32x256xbf16> to vector<32x241xbf16>
    %33 = tpu.concatenate %31, %32 in 1 : vector<32x15xbf16>, vector<32x241xbf16> -> vector<32x256xbf16>
    %c14_i32 = arith.constant 14 : i32
    %34 = vector.broadcast %c14_i32 : i32 to vector<1x256xi32>
    %35 = arith.cmpi sle, %18, %34 : vector<1x256xi32>
    %cst_8 = arith.constant 0.000000e+00 : bf16
    %36 = vector.broadcast %cst_8 : bf16 to vector<32x256xbf16>
    %37 = vector.shape_cast %35 : vector<1x256xi1> to vector<1x256xi1>
    %38 = vector.broadcast %37 : vector<1x256xi1> to vector<32x256xi1>
    %39 = arith.select %38, %33, %36 : vector<32x256xi1>, vector<32x256xbf16>
    %cst_9 = arith.constant 0.000000e+00 : bf16
    %40 = vector.broadcast %cst_9 : bf16 to vector<32x1xbf16>
    %41 = vector.extract_strided_slice %1 {offsets = [0, 0], sizes = [32, 255], strides = [1, 1]} : vector<32x256xbf16> to vector<32x255xbf16>
    %42 = tpu.concatenate %40, %41 in 1 : vector<32x1xbf16>, vector<32x255xbf16> -> vector<32x256xbf16>
    %c1_i32_10 = arith.constant 1 : i32
    %43 = vector.broadcast %c1_i32_10 : i32 to vector<1x256xi32>
    %44 = arith.cmpi sge, %18, %43 : vector<1x256xi32>
    %cst_11 = arith.constant 0.000000e+00 : bf16
    %45 = vector.broadcast %cst_11 : bf16 to vector<32x256xbf16>
    %46 = vector.shape_cast %44 : vector<1x256xi1> to vector<1x256xi1>
    %47 = vector.broadcast %46 : vector<1x256xi1> to vector<32x256xi1>
    %48 = arith.select %47, %42, %45 : vector<32x256xi1>, vector<32x256xbf16>
    %cst_12 = arith.constant 0.000000e+00 : bf16
    %49 = vector.broadcast %cst_12 : bf16 to vector<32x1xbf16>
    %50 = vector.extract_strided_slice %1 {offsets = [0, 1], sizes = [32, 255], strides = [1, 1]} : vector<32x256xbf16> to vector<32x255xbf16>
    %51 = tpu.concatenate %50, %49 in 1 : vector<32x255xbf16>, vector<32x1xbf16> -> vector<32x256xbf16>
    %c14_i32_13 = arith.constant 14 : i32
    %52 = vector.broadcast %c14_i32_13 : i32 to vector<1x256xi32>
    %53 = arith.cmpi sle, %18, %52 : vector<1x256xi32>
    %cst_14 = arith.constant 0.000000e+00 : bf16
    %54 = vector.broadcast %cst_14 : bf16 to vector<32x256xbf16>
    %55 = vector.shape_cast %53 : vector<1x256xi1> to vector<1x256xi1>
    %56 = vector.broadcast %55 : vector<1x256xi1> to vector<32x256xi1>
    %57 = arith.select %56, %51, %54 : vector<32x256xi1>, vector<32x256xbf16>
    %cst_15 = arith.constant 0.000000e+00 : bf16
    %58 = vector.broadcast %cst_15 : bf16 to vector<32x15xbf16>
    %59 = vector.extract_strided_slice %1 {offsets = [0, 15], sizes = [32, 241], strides = [1, 1]} : vector<32x256xbf16> to vector<32x241xbf16>
    %60 = tpu.concatenate %59, %58 in 1 : vector<32x241xbf16>, vector<32x15xbf16> -> vector<32x256xbf16>
    %c1_i32_16 = arith.constant 1 : i32
    %61 = vector.broadcast %c1_i32_16 : i32 to vector<1x256xi32>
    %62 = arith.cmpi sge, %18, %61 : vector<1x256xi32>
    %cst_17 = arith.constant 0.000000e+00 : bf16
    %63 = vector.broadcast %cst_17 : bf16 to vector<32x256xbf16>
    %64 = vector.shape_cast %62 : vector<1x256xi1> to vector<1x256xi1>
    %65 = vector.broadcast %64 : vector<1x256xi1> to vector<32x256xi1>
    %66 = arith.select %65, %60, %63 : vector<32x256xi1>, vector<32x256xbf16>
    %cst_18 = arith.constant 0.000000e+00 : bf16
    %67 = vector.broadcast %cst_18 : bf16 to vector<32x16xbf16>
    %68 = vector.extract_strided_slice %1 {offsets = [0, 16], sizes = [32, 240], strides = [1, 1]} : vector<32x256xbf16> to vector<32x240xbf16>
    %69 = tpu.concatenate %68, %67 in 1 : vector<32x240xbf16>, vector<32x16xbf16> -> vector<32x256xbf16>
    %cst_19 = arith.constant 0.000000e+00 : bf16
    %70 = vector.broadcast %cst_19 : bf16 to vector<32x17xbf16>
    %71 = vector.extract_strided_slice %1 {offsets = [0, 17], sizes = [32, 239], strides = [1, 1]} : vector<32x256xbf16> to vector<32x239xbf16>
    %72 = tpu.concatenate %71, %70 in 1 : vector<32x239xbf16>, vector<32x17xbf16> -> vector<32x256xbf16>
    %c14_i32_20 = arith.constant 14 : i32
    %73 = vector.broadcast %c14_i32_20 : i32 to vector<1x256xi32>
    %74 = arith.cmpi sle, %18, %73 : vector<1x256xi32>
    %cst_21 = arith.constant 0.000000e+00 : bf16
    %75 = vector.broadcast %cst_21 : bf16 to vector<32x256xbf16>
    %76 = vector.shape_cast %74 : vector<1x256xi1> to vector<1x256xi1>
    %77 = vector.broadcast %76 : vector<1x256xi1> to vector<32x256xi1>
    %78 = arith.select %77, %72, %75 : vector<32x256xi1>, vector<32x256xbf16>
    %79 = tpu.concatenate %27, %30, %39, %48, %1, %57, %66, %69, %78 in 0 : vector<32x256xbf16>, vector<32x256xbf16>, vector<32x256xbf16>, vector<32x256xbf16>, vector<32x256xbf16>, vector<32x256xbf16>, vector<32x256xbf16>, vector<32x256xbf16>, vector<32x256xbf16> -> vector<288x256xbf16>
    %c0_22 = arith.constant 0 : index
    %c0_23 = arith.constant 0 : index
    %80 = vector.load %arg3[%c0_22, %c0_23] : memref<96x8xf32, #tpu.memory_space<vmem>>, vector<96x1xf32>
    %c0_24 = arith.constant 0 : index
    %c1 = arith.constant 1 : index
    %81 = vector.load %arg3[%c0_24, %c1] : memref<96x8xf32, #tpu.memory_space<vmem>>, vector<96x1xf32>
    %c0_25 = arith.constant 0 : index
    %c2 = arith.constant 2 : index
    %82 = vector.load %arg3[%c0_25, %c2] : memref<96x8xf32, #tpu.memory_space<vmem>>, vector<96x1xf32>
    %c0_26 = arith.constant 0 : index
    %c0_27 = arith.constant 0 : index
    %83 = vector.load %arg2[%c0_26, %c0_27] : memref<96x288xbf16, #tpu.memory_space<vmem>>, vector<96x288xbf16>
    %cst_28 = arith.constant dense<0.000000e+00> : vector<96x256xf32>
    %84 = tpu.matmul %83, %79, %cst_28 {dimension_numbers = #tpu.dot_dimension_numbers<[1], [0], [0], [1], [0, 0, 1, 1], [], []>} : vector<96x288xbf16>, vector<288x256xbf16>, vector<96x256xf32> -> vector<96x256xf32>
    %85 = vector.broadcast %80 : vector<96x1xf32> to vector<96x256xf32>
    %86 = arith.addf %84, %85 : vector<96x256xf32>
    %cst_29 = arith.constant dense<0.000000e+00> : vector<96xf32>
    %87 = vector.multi_reduction <add>, %86, %cst_29 [1] : vector<96x256xf32> to vector<96xf32>
    %88 = vector.shape_cast %87 : vector<96xf32> to vector<96x1xf32>
    %89 = arith.mulf %86, %86 : vector<96x256xf32>
    %cst_30 = arith.constant dense<0.000000e+00> : vector<96xf32>
    %90 = vector.multi_reduction <add>, %89, %cst_30 [1] : vector<96x256xf32> to vector<96xf32>
    %91 = vector.shape_cast %90 : vector<96xf32> to vector<96x1xf32>
    %92 = tpu.concatenate %88, %91 in 1 : vector<96x1xf32>, vector<96x1xf32> -> vector<96x2xf32>
    %c0_31 = arith.constant 0 : index
    %c0_32 = arith.constant 0 : index
    %93 = vector.load %arg4[%c0_31, %c0_32] : memref<48x96xf32, #tpu.memory_space<vmem>>, vector<48x96xf32>
    %cst_33 = arith.constant dense<0.000000e+00> : vector<48x2xf32>
    %94 = tpu.matmul %93, %92, %cst_33 {dimension_numbers = #tpu.dot_dimension_numbers<[1], [0], [0], [1], [0, 0, 1, 1], [], []>} : vector<48x96xf32>, vector<96x2xf32>, vector<48x2xf32> -> vector<48x2xf32>
    %95 = vector.extract_strided_slice %94 {offsets = [0, 0], sizes = [48, 1], strides = [1, 1]} : vector<48x2xf32> to vector<48x1xf32>
    %cst_34 = arith.constant 5.120000e+02 : f32
    %96 = vector.broadcast %cst_34 : f32 to vector<48x1xf32>
    %97 = arith.divf %95, %96 : vector<48x1xf32>
    %98 = vector.extract_strided_slice %94 {offsets = [0, 1], sizes = [48, 1], strides = [1, 1]} : vector<48x2xf32> to vector<48x1xf32>
    %cst_35 = arith.constant 5.120000e+02 : f32
    %99 = vector.broadcast %cst_35 : f32 to vector<48x1xf32>
    %100 = arith.divf %98, %99 : vector<48x1xf32>
    %101 = arith.mulf %97, %97 : vector<48x1xf32>
    %102 = arith.subf %100, %101 : vector<48x1xf32>
    %cst_36 = arith.constant 9.99999974E-6 : f32
    %103 = vector.broadcast %cst_36 : f32 to vector<48x1xf32>
    %104 = arith.addf %102, %103 : vector<48x1xf32>
    %105 = math.rsqrt %104 : vector<48x1xf32>
    %106 = tpu.concatenate %97, %105 in 1 : vector<48x1xf32>, vector<48x1xf32> -> vector<48x2xf32>
    %c0_37 = arith.constant 0 : index
    %c0_38 = arith.constant 0 : index
    %107 = vector.load %arg5[%c0_37, %c0_38] : memref<96x48xf32, #tpu.memory_space<vmem>>, vector<96x48xf32>
    %cst_39 = arith.constant dense<0.000000e+00> : vector<96x2xf32>
    %108 = tpu.matmul %107, %106, %cst_39 {dimension_numbers = #tpu.dot_dimension_numbers<[1], [0], [0], [1], [0, 0, 1, 1], [], []>} : vector<96x48xf32>, vector<48x2xf32>, vector<96x2xf32> -> vector<96x2xf32>
    %109 = vector.extract_strided_slice %108 {offsets = [0, 0], sizes = [96, 1], strides = [1, 1]} : vector<96x2xf32> to vector<96x1xf32>
    %110 = vector.broadcast %109 : vector<96x1xf32> to vector<96x256xf32>
    %111 = arith.subf %86, %110 : vector<96x256xf32>
    %112 = vector.extract_strided_slice %108 {offsets = [0, 1], sizes = [96, 1], strides = [1, 1]} : vector<96x2xf32> to vector<96x1xf32>
    %113 = arith.mulf %112, %81 : vector<96x1xf32>
    %114 = vector.broadcast %113 : vector<96x1xf32> to vector<96x256xf32>
    %115 = arith.mulf %111, %114 : vector<96x256xf32>
    %116 = vector.broadcast %82 : vector<96x1xf32> to vector<96x256xf32>
    %117 = arith.addf %115, %116 : vector<96x256xf32>
    %118 = vector.extract_strided_slice %117 {offsets = [0, 0], sizes = [32, 256], strides = [1, 1]} : vector<96x256xf32> to vector<32x256xf32>
    %119 = vector.extract_strided_slice %117 {offsets = [32, 0], sizes = [32, 256], strides = [1, 1]} : vector<96x256xf32> to vector<32x256xf32>
    %120 = vector.extract_strided_slice %117 {offsets = [64, 0], sizes = [32, 256], strides = [1, 1]} : vector<96x256xf32> to vector<32x256xf32>
    %121 = arith.addf %119, %120 : vector<32x256xf32>
    %122 = tpu.concatenate %118, %121 in 0 : vector<32x256xf32>, vector<32x256xf32> -> vector<64x256xf32>
    %cst_40 = arith.constant dense<0.000000e+00> : vector<64xf32>
    %123 = vector.multi_reduction <add>, %122, %cst_40 [1] : vector<64x256xf32> to vector<64xf32>
    %124 = vector.shape_cast %123 : vector<64xf32> to vector<64x1xf32>
    %cst_41 = arith.constant 3.906250e-03 : f32
    %125 = vector.broadcast %cst_41 : f32 to vector<64x1xf32>
    %126 = arith.mulf %124, %125 : vector<64x1xf32>
    %cst_42 = arith.constant 0.000000e+00 : f32
    %127 = vector.broadcast %cst_42 : f32 to vector<2x1xf32>
    %cst_43 = arith.constant 0.000000e+00 : f32
    %128 = vector.broadcast %cst_43 : f32 to vector<2x1xf32>
    %129 = tpu.concatenate %127, %126, %128 in 0 : vector<2x1xf32>, vector<64x1xf32>, vector<2x1xf32> -> vector<68x1xf32>
    %cst_44 = arith.constant 0.000000e+00 : f32
    %130 = vector.broadcast %cst_44 : f32 to vector<64x1xf32>
    %c0_45 = arith.constant 0 : index
    %c3 = arith.constant 3 : index
    %131 = vector.load %arg3[%c0_45, %c3] : memref<96x8xf32, #tpu.memory_space<vmem>>, vector<64x1xf32>
    %132 = vector.extract_strided_slice %129 {offsets = [0, 0], sizes = [64, 1], strides = [1, 1]} : vector<68x1xf32> to vector<64x1xf32>
    %133 = arith.mulf %131, %132 : vector<64x1xf32>
    %134 = arith.addf %130, %133 : vector<64x1xf32>
    %c0_46 = arith.constant 0 : index
    %c4 = arith.constant 4 : index
    %135 = vector.load %arg3[%c0_46, %c4] : memref<96x8xf32, #tpu.memory_space<vmem>>, vector<64x1xf32>
    %136 = vector.extract_strided_slice %129 {offsets = [1, 0], sizes = [64, 1], strides = [1, 1]} : vector<68x1xf32> to vector<64x1xf32>
    %137 = arith.mulf %135, %136 : vector<64x1xf32>
    %138 = arith.addf %134, %137 : vector<64x1xf32>
    %c0_47 = arith.constant 0 : index
    %c5 = arith.constant 5 : index
    %139 = vector.load %arg3[%c0_47, %c5] : memref<96x8xf32, #tpu.memory_space<vmem>>, vector<64x1xf32>
    %140 = vector.extract_strided_slice %129 {offsets = [2, 0], sizes = [64, 1], strides = [1, 1]} : vector<68x1xf32> to vector<64x1xf32>
    %141 = arith.mulf %139, %140 : vector<64x1xf32>
    %142 = arith.addf %138, %141 : vector<64x1xf32>
    %c0_48 = arith.constant 0 : index
    %c6 = arith.constant 6 : index
    %143 = vector.load %arg3[%c0_48, %c6] : memref<96x8xf32, #tpu.memory_space<vmem>>, vector<64x1xf32>
    %144 = vector.extract_strided_slice %129 {offsets = [3, 0], sizes = [64, 1], strides = [1, 1]} : vector<68x1xf32> to vector<64x1xf32>
    %145 = arith.mulf %143, %144 : vector<64x1xf32>
    %146 = arith.addf %142, %145 : vector<64x1xf32>
    %c0_49 = arith.constant 0 : index
    %c7 = arith.constant 7 : index
    %147 = vector.load %arg3[%c0_49, %c7] : memref<96x8xf32, #tpu.memory_space<vmem>>, vector<64x1xf32>
    %148 = vector.extract_strided_slice %129 {offsets = [4, 0], sizes = [64, 1], strides = [1, 1]} : vector<68x1xf32> to vector<64x1xf32>
    %149 = arith.mulf %147, %148 : vector<64x1xf32>
    %150 = arith.addf %146, %149 : vector<64x1xf32>
    %cst_50 = arith.constant 0.000000e+00 : f32
    %151 = vector.broadcast %cst_50 : f32 to vector<64x1xf32>
    %152 = arith.subf %151, %150 : vector<64x1xf32>
    %153 = math.exp %152 : vector<64x1xf32>
    %cst_51 = arith.constant 1.000000e+00 : f32
    %154 = vector.broadcast %cst_51 : f32 to vector<64x1xf32>
    %155 = arith.addf %154, %153 : vector<64x1xf32>
    %cst_52 = arith.constant 1.000000e+00 : f32
    %156 = vector.broadcast %cst_52 : f32 to vector<64x1xf32>
    %157 = arith.divf %156, %155 : vector<64x1xf32>
    %158 = vector.broadcast %157 : vector<64x1xf32> to vector<64x256xf32>
    %159 = arith.mulf %122, %158 : vector<64x256xf32>
    %c0_53 = arith.constant 0 : index
    %c0_54 = arith.constant 0 : index
    %160 = vector.load %arg6[%c0_53, %c0_54] : memref<64x256xf32, #tpu.memory_space<vmem>>, vector<64x256xf32>
    tpu.vector_store %arg6[%c0_53, %c0_54], %159 {strides = array<i32>} : memref<64x256xf32, #tpu.memory_space<vmem>>, vector<64x256xf32>,
    return
  }
  func.func @transform_0(%arg0: i32) -> (i32, i32) {
    %c0_i32 = arith.constant 0 : i32
    %c0_i32_0 = arith.constant 0 : i32
    return %arg0, %c0_i32 : i32, i32
  }
  func.func @transform_1(%arg0: i32) -> (i32, i32) {
    %c0_i32 = arith.constant 0 : i32
    %c0_i32_0 = arith.constant 0 : i32
    %c0_i32_1 = arith.constant 0 : i32
    return %c0_i32, %c0_i32_0 : i32, i32
  }
  func.func @transform_2(%arg0: i32) -> (i32, i32) {
    %c0_i32 = arith.constant 0 : i32
    %c0_i32_0 = arith.constant 0 : i32
    %c0_i32_1 = arith.constant 0 : i32
    return %c0_i32, %c0_i32_0 : i32, i32
  }
  func.func @transform_3(%arg0: i32) -> (i32, i32) {
    %c0_i32 = arith.constant 0 : i32
    %c0_i32_0 = arith.constant 0 : i32
    %c0_i32_1 = arith.constant 0 : i32
    return %c0_i32, %c0_i32_0 : i32, i32
  }
  func.func @transform_4(%arg0: i32) -> (i32, i32) {
    %c0_i32 = arith.constant 0 : i32
    %c0_i32_0 = arith.constant 0 : i32
    %c0_i32_1 = arith.constant 0 : i32
    return %c0_i32, %c0_i32_0 : i32, i32
  }
  func.func @transform_5(%arg0: i32) -> (i32, i32) {
    %c0_i32 = arith.constant 0 : i32
    %c0_i32_0 = arith.constant 0 : i32
    return %arg0, %c0_i32 : i32, i32
  }
}

</mosaic_0001>

<llo_original>
// kernel: tpu_custom_call.1
$region0: #{tpu_custom_call.1}
  #allocation0 [shape = 'u32[]', space=smem, size = 0x4, offset = 0x4, fixed_abs, tag = 'smem constant byte address 0x4 - core index']
  #allocation1 [shape = 'u32[144,128]{1,0:T(1,128)}', space=vmem, size = 0x12000, scoped, tag = 'internal scratch']
  %s0 = inlined_call_operand.hbm [shape: f32[64,256], index: 0, kind: input, shape index: {}]
  %s1 = inlined_call_operand.vmem [shape: bf16[96,288], index: 1, kind: input, shape index: {}]
  %s2 = inlined_call_operand.vmem [shape: f32[96,8], index: 2, kind: input, shape index: {}]
  %s3 = inlined_call_operand.vmem [shape: f32[48,96], index: 3, kind: input, shape index: {}]
  %s4 = inlined_call_operand.vmem [shape: f32[96,48], index: 4, kind: input, shape index: {}]
  %s5 = inlined_call_operand.hbm [shape: f32[128,256], index: 5, kind: output, shape index: {}]
  %s6 = sld [smem:[#allocation0]]
  $region57: #{tpu_custom_call.1} parent=0
    _
  %s8 = ssub.s32 1, %s6
  %s9 = scalar_select 0, %s8, %s6
  $region1: #{tpu_custom_call.1} parent=0
    #allocation2 [shape = 'u8[65536]{0}', space=vmem, size = 0x10000, scoped, tag = 'input window, operand 0']
    #allocation3 [shape = 's32[2]{0}', space=sflag, size = 0x8, scoped, tag = 'scoped memory for tpu_custom_call.1']
    #allocation4 [shape = 's32[2]{0}', space=sflag, size = 0x8, scoped, tag = 'scoped memory for tpu_custom_call.1']
    #allocation5 [shape = 'u8[131072]{0}', space=vmem, size = 0x20000, scoped, tag = 'output window, operand 0']
    %10 = vsyncpa [#allocation3], 0
    %s11 = scalar_lea.sflag [#allocation3], 1
    %12 = vsyncpa %s11, 0
    %13 = vsyncpa [#allocation4], 0
    %s14 = scalar_lea.sflag [#allocation4], 1
    %15 = vsyncpa %s14, 0
    loop: start=0, step=1, limit=4
    $region2: #{tpu_custom_call.1} parent=1 // loop_pre_header
      _
    $region3: #{tpu_custom_call.1} parent=1 // loop_header
      %s17 = sphi 0, %s21
      %p18 = scmp.ge.s32.totalorder %s17, 4
      %s27 = sphi 0, %s29
      %s30 = sphi 0, %s27
      %s31 = sphi 0, %s30
      %s47 = sphi 0, %s31
      %s51 = sphi 0, %s51
      %s53 = sphi 0, %s51
      %s54 = sphi 0, %s53
      %s68 = sphi 0, %s54
      %s72 = sphi 0, %s72
      %s74 = sphi 0, %s72
      %s75 = sphi 0, %s74
      %s89 = sphi 0, %s75
      %s93 = sphi 0, %s93
      %s95 = sphi 0, %s93
      %s96 = sphi 0, %s95
      %s110 = sphi 0, %s96
      %s114 = sphi 0, %s114
      %s116 = sphi 0, %s114
      %s117 = sphi 0, %s116
      %s131 = sphi 0, %s117
      %s137 = sphi 0, %s139
      %s140 = sphi 0, %s137
      %s141 = sphi 0, %s140
      %s157 = sphi 0, %s141
    $region4: #{tpu_custom_call.1} parent=1 // loop_header_branch
      %20 = sbr.rel (%p18) target = $region8
    $region5: #{tpu_custom_call.1} parent=1 // loop_body
      %s22 = ssub.s32 %s17, 1
      %s23 = ssub.s32 %s17, 2
      %s24 = sadd.s32 %s17, 1
      %s25 = ssub.s32 %s17, %s24
      %p26 = scmp.eq.s32.totalorder %s25, 0
      %s28 = sadd.s32 %s27, 1
      %s29 = scalar_select %p26, %s27, %s28
      %p32 = pneg %p26
      %p33 = scmp.eq.s32.totalorder %s17, 1
      %p34 = por %p32, %p33
      %p35 = scmp.ne.s32.totalorder %s27, %s30
      %p36 = scmp.eq.s32.totalorder %s17, 0
      %p37 = por %p35, %p36
      %p38 = scmp.ne.s32.totalorder %s27, %s30
      %p39 = scmp.eq.s32.totalorder %s22, 1
      %p40 = por %p38, %p39
      %p41 = scmp.ne.s32.totalorder %s30, %s31
      %p42 = scmp.eq.s32.totalorder %s22, 0
      %p43 = por %p41, %p42
      %p44 = scmp.ne.s32.totalorder %s30, %s31
      %p45 = scmp.eq.s32.totalorder %s23, 1
      %p46 = por %p44, %p45
      %p48 = scmp.ne.s32.totalorder %s31, %s47
      %p49 = scmp.eq.s32.totalorder %s23, 0
      %p50 = por %p48, %p49
      %s52 = sadd.s32 %s51, 1
      %p55 = scmp.eq.s32.totalorder %s17, 1
      %p56 = scmp.ne.s32.totalorder %s51, %s53
      %p57 = scmp.eq.s32.totalorder %s17, 0
      %p58 = por %p56, %p57
      %p59 = scmp.ne.s32.totalorder %s51, %s53
      %p60 = scmp.eq.s32.totalorder %s22, 1
      %p61 = por %p59, %p60
      %p62 = scmp.ne.s32.totalorder %s53, %s54
      %p63 = scmp.eq.s32.totalorder %s22, 0
      %p64 = por %p62, %p63
      %p65 = scmp.ne.s32.totalorder %s53, %s54
      %p66 = scmp.eq.s32.totalorder %s23, 1
      %p67 = por %p65, %p66
      %p69 = scmp.ne.s32.totalorder %s54, %s68
      %p70 = scmp.eq.s32.totalorder %s23, 0
      %p71 = por %p69, %p70
      %s73 = sadd.s32 %s72, 1
      %p76 = scmp.eq.s32.totalorder %s17, 1
      %p77 = scmp.ne.s32.totalorder %s72, %s74
      %p78 = scmp.eq.s32.totalorder %s17, 0
      %p79 = por %p77, %p78
      %p80 = scmp.ne.s32.totalorder %s72, %s74
      %p81 = scmp.eq.s32.totalorder %s22, 1
      %p82 = por %p80, %p81
      %p83 = scmp.ne.s32.totalorder %s74, %s75
      %p84 = scmp.eq.s32.totalorder %s22, 0
      %p85 = por %p83, %p84
      %p86 = scmp.ne.s32.totalorder %s74, %s75
      %p87 = scmp.eq.s32.totalorder %s23, 1
      %p88 = por %p86, %p87
      %p90 = scmp.ne.s32.totalorder %s75, %s89
      %p91 = scmp.eq.s32.totalorder %s23, 0
      %p92 = por %p90, %p91
      %s94 = sadd.s32 %s93, 1
      %p97 = scmp.eq.s32.totalorder %s17, 1
      %p98 = scmp.ne.s32.totalorder %s93, %s95
      %p99 = scmp.eq.s32.totalorder %s17, 0
      %p100 = por %p98, %p99
      %p101 = scmp.ne.s32.totalorder %s93, %s95
      %p102 = scmp.eq.s32.totalorder %s22, 1
      %p103 = por %p101, %p102
      %p104 = scmp.ne.s32.totalorder %s95, %s96
      %p105 = scmp.eq.s32.totalorder %s22, 0
      %p106 = por %p104, %p105
      %p107 = scmp.ne.s32.totalorder %s95, %s96
      %p108 = scmp.eq.s32.totalorder %s23, 1
      %p109 = por %p107, %p108
      %p111 = scmp.ne.s32.totalorder %s96, %s110
      %p112 = scmp.eq.s32.totalorder %s23, 0
      %p113 = por %p111, %p112
      %s115 = sadd.s32 %s114, 1
      %p118 = scmp.eq.s32.totalorder %s17, 1
      %p119 = scmp.ne.s32.totalorder %s114, %s116
      %p120 = scmp.eq.s32.totalorder %s17, 0
      %p121 = por %p119, %p120
      %p122 = scmp.ne.s32.totalorder %s114, %s116
      %p123 = scmp.eq.s32.totalorder %s22, 1
      %p124 = por %p122, %p123
      %p125 = scmp.ne.s32.totalorder %s116, %s117
      %p126 = scmp.eq.s32.totalorder %s22, 0
      %p127 = por %p125, %p126
      %p128 = scmp.ne.s32.totalorder %s116, %s117
      %p129 = scmp.eq.s32.totalorder %s23, 1
      %p130 = por %p128, %p129
      %p132 = scmp.ne.s32.totalorder %s117, %s131
      %p133 = scmp.eq.s32.totalorder %s23, 0
      %p134 = por %p132, %p133
      %s135 = ssub.s32 %s17, %s24
      %p136 = scmp.eq.s32.totalorder %s135, 0
      %s138 = sadd.s32 %s137, 1
      %s139 = scalar_select %p136, %s137, %s138
      %p142 = pneg %p136
      %p143 = scmp.eq.s32.totalorder %s17, 1
      %p144 = por %p142, %p143
      %p145 = scmp.ne.s32.totalorder %s137, %s140
      %p146 = scmp.eq.s32.totalorder %s17, 0
      %p147 = por %p145, %p146
      %p148 = scmp.ne.s32.totalorder %s137, %s140
      %p149 = scmp.eq.s32.totalorder %s22, 1
      %p150 = por %p148, %p149
      %p151 = scmp.ne.s32.totalorder %s140, %s141
      %p152 = scmp.eq.s32.totalorder %s22, 0
      %p153 = por %p151, %p152
      %p154 = scmp.ne.s32.totalorder %s140, %s141
      %p155 = scmp.eq.s32.totalorder %s23, 1
      %p156 = por %p154, %p155
      %p158 = scmp.ne.s32.totalorder %s141, %s157
      %p159 = scmp.eq.s32.totalorder %s23, 0
      %p160 = por %p158, %p159
      %p161 = scmp.le.s32.totalorder 1, %s17
      %p162 = scmp.lt.s32.totalorder %s17, 3
      %p163 = pnand %p161, %p162
      %p164 = pneg %p163
      // Predicated region
      $region9: #{tpu_custom_call.1} parent=5 // pred_check
        _
      $region10: #{tpu_custom_call.1} parent=5 // pred_check_branch
        %166 = sbr.rel (%p163) target = $region12
      $region11: #{tpu_custom_call.1} parent=5 // pred_region
        %s167 = ssub.s32 %s17, 1
        // Predicated region
        $region13: #{tpu_custom_call.1} parent=11 // pred_check
          %p168 = pneg %p64
        $region14: #{tpu_custom_call.1} parent=11 // pred_check_branch
          %170 = sbr.rel (%p168) target = $region16
        $region15: #{tpu_custom_call.1} parent=11 // pred_region
          _
        $region16: #{tpu_custom_call.1} parent=11 // pred_fallthru
          _
        // Predicated region
        $region17: #{tpu_custom_call.1} parent=11 // pred_check
          %p171 = pneg %p85
        $region18: #{tpu_custom_call.1} parent=11 // pred_check_branch
          %173 = sbr.rel (%p171) target = $region20
        $region19: #{tpu_custom_call.1} parent=11 // pred_region
          _
        $region20: #{tpu_custom_call.1} parent=11 // pred_fallthru
          _
        // Predicated region
        $region21: #{tpu_custom_call.1} parent=11 // pred_check
          %p174 = pneg %p106
        $region22: #{tpu_custom_call.1} parent=11 // pred_check_branch
          %176 = sbr.rel (%p174) target = $region24
        $region23: #{tpu_custom_call.1} parent=11 // pred_region
          _
        $region24: #{tpu_custom_call.1} parent=11 // pred_fallthru
          _
        // Predicated region
        $region25: #{tpu_custom_call.1} parent=11 // pred_check
          %p177 = pneg %p127
        $region26: #{tpu_custom_call.1} parent=11 // pred_check_branch
          %179 = sbr.rel (%p177) target = $region28
        $region27: #{tpu_custom_call.1} parent=11 // pred_region
          _
        $region28: #{tpu_custom_call.1} parent=11 // pred_fallthru
          _
      $region12: #{tpu_custom_call.1} parent=5 // pred_fallthru
        _
      %p180 = scmp.lt.s32.totalorder %s17, 2
      // Predicated region
      $region29: #{tpu_custom_call.1} parent=5 // pred_check
        %p181 = pneg %p180
      $region30: #{tpu_custom_call.1} parent=5 // pred_check_branch
        %183 = sbr.rel (%p181) target = $region32
      $region31: #{tpu_custom_call.1} parent=5 // pred_region
        // Predicated region
        $region33: #{tpu_custom_call.1} parent=31 // pred_check
          %p184 = pneg %p37
        $region34: #{tpu_custom_call.1} parent=31 // pred_check_branch
          %186 = sbr.rel (%p184) target = $region36
        $region35: #{tpu_custom_call.1} parent=31 // pred_region
          %s187 = sand.u32 %s27, 1
          %s188 = scalar_lea.sflag [#allocation3], %s187
          %s189 = sand.u32 %s27, 1
          %s190 = smul.addr %s189, 64
          %s191 = scalar_lea.vmem [#allocation2], %s190
          %s192 = smul.u32 4, %s17
          %s194 = ssub.s32 1024, 1024
          %195 = vsyncadd %s188, %s194
          %s196 = smul.addr %s192, 2
          %s197 = smul.addr %s196, 128
          %s198 = scalar_lea.hbm %s0, %s197
          %s199 = sshll.u32 %s191, 4
          %s200 = int_to_ptr.vmem [resolvable:$true] %s199
          %205 = dma.hbm_to_vmem [thread:$0]  %s198, 1024, %s200, %s188, 256, 256, 16
        $region36: #{tpu_custom_call.1} parent=31 // pred_fallthru
          _
      $region32: #{tpu_custom_call.1} parent=5 // pred_fallthru
        _
      %p206 = scmp.le.s32.totalorder 1, %s17
      %p207 = scmp.lt.s32.totalorder %s17, 3
      %p208 = pnand %p206, %p207
      %p209 = pneg %p208
      // Predicated region
      $region37: #{tpu_custom_call.1} parent=5 // pred_check
        _
      $region38: #{tpu_custom_call.1} parent=5 // pred_check_branch
        %211 = sbr.rel (%p208) target = $region40
      $region39: #{tpu_custom_call.1} parent=5 // pred_region
        %s212 = ssub.s32 %s17, 1
        %s213 = sand.u32 %s30, 1
        %s214 = scalar_lea.sflag [#allocation3], %s213
        %s215 = sand.u32 %s30, 1
        %s216 = smul.addr %s215, 64
        %s217 = scalar_lea.vmem [#allocation2], %s216
        // Predicated region
        $region41: #{tpu_custom_call.1} parent=39 // pred_check
          %p218 = pneg %p43
        $region42: #{tpu_custom_call.1} parent=39 // pred_check_branch
          %220 = sbr.rel (%p218) target = $region44
        $region43: #{tpu_custom_call.1} parent=39 // pred_region
          %221 = dma.done %s214, 1024
        $region44: #{tpu_custom_call.1} parent=39 // pred_fallthru
          _
        %s222 = sand.u32 %s30, 1
        %s223 = scalar_lea.sflag [#allocation3], %s222
        %s224 = sand.u32 %s30, 1
        %s225 = smul.addr %s224, 64
        %s226 = scalar_lea.vmem [#allocation2], %s225
        %p227 = pneg %p43
        %p228 = pneg %p40
        %p229 = pneg %p64
        %p230 = pneg %p61
        %p231 = pneg %p85
        %p232 = pneg %p82
        %p233 = pneg %p106
        %p234 = pneg %p103
        %p235 = pneg %p127
        %p236 = pneg %p124
        %p237 = pneg %p153
        %p238 = pneg %p150
        %s239 = sand.u32 %s140, 1
        %s240 = scalar_lea.sflag [#allocation4], %s239
        %s241 = sand.u32 %s140, 1
        %s242 = smul.addr %s241, 128
        %s243 = scalar_lea.vmem [#allocation5], %s242
        %s244 = smul.u32 4, %s22
        %s245 = smul.u32 8, %s22
        %v249 = vld [vmem:[%s217] sm:$0xff]
        %v250 = vld [vmem:[%s217 + $0x8] sm:$0xff]
        %v251 = vld [vmem:[%s217 + $0x10] sm:$0xff]
        %v252 = vld [vmem:[%s217 + $0x18] sm:$0xff]
        %v253 = vld [vmem:[%s217 + $0x20] sm:$0xff]
        %v254 = vld [vmem:[%s217 + $0x28] sm:$0xff]
        %v255 = vld [vmem:[%s217 + $0x30] sm:$0xff]
        %v256 = vld [vmem:[%s217 + $0x38] sm:$0xff]
        %v257 = vpack.c.bf16 %v251, %v249
        %v258 = vpack.c.bf16 %v252, %v250
        %v259 = vpack.c.bf16 %v255, %v253
        %v260 = vpack.c.bf16 %v256, %v254
        %v261 = vlaneseq
        %v262 = vand.u32 %v261, 127
        %v263 = vadd.s32 %v262, 128
        %vm264 = vcmp.lt.s32.totalorder %v262, 0
        %v265 = vsub.s32 0, %v262
        %v266 = vsel %vm264, %v265, %v262
        %v267 = vshrl.u32 %v266, 4
        %v268 = vand.u32 %v266, 15
        %v269 = vsub.s32 0, %v268
        %v270 = vsel %vm264, %v269, %v268
        %vm271 = vcmp.lt.s32.totalorder %v263, 0
        %v272 = vsub.s32 0, %v263
        %v273 = vsel %vm271, %v272, %v263
        %v274 = vshrl.u32 %v273, 4
        %v275 = vand.u32 %v273, 15
        %v276 = vsub.s32 0, %v275
        %v277 = vsel %vm271, %v276, %v275
        %vm278 = vcmp.ne.s32.totalorder %v270, 0
        %vm279 = vcmp.ne.s32.totalorder %v277, 0
        %vm280 = vcmp.lt.s32.totalorder %v270, 0
        %vm281 = vcmp.lt.s32.totalorder %v277, 0
        %vm282 = vmand %vm280, %vm278
        %vm283 = vmand %vm281, %vm279
        %v284 = vadd.s32 %v270, 16
        %v285 = vadd.s32 %v277, 16
        %v286 = vsel %vm282, %v284, %v270
        %v287 = vsel %vm283, %v285, %v277
        %292 = vrot.lane.b32.xlu0 %v257, 17
        %v293 = vpop.permute.xlu0 %292
        %294 = vrot.lane.b32.xlu0 %v258, 17
        %v295 = vpop.permute.xlu0 %294
        %296 = vrot.lane.b32.xlu0 %v259, 17
        %v297 = vpop.permute.xlu0 %296
        %298 = vrot.lane.b32.xlu0 %v260, 17
        %v299 = vpop.permute.xlu0 %298
        %vm300 = vcmask 138240
        %v301 = vsel %vm300, %v293, %v295
        %v302 = vsel %vm300, %v297, %v299
        %vm305 = vcmask 138240
        %v308 = vsel %vm305, 0, %v293
        %v311 = vsel %vm305, 0, %v297
        %vm313 = vcmp.ge.s32.totalorder %v286, 1
        %vm314 = vcmp.ge.s32.totalorder %v287, 1
        %v315 = vsel %vm313, 1, 0
        %v316 = vsel %vm314, 1, 0
        %vm317 = vcmp.eq.s32.totalorder %v315, 1
        %vm318 = vcmp.eq.s32.totalorder %v316, 1
        %vm319 = vmpackc.low %vm318, %vm317
        %v320 = vsel %vm319, 65537, 0
        %v321 = vlaneseq
        %v322 = vshrl.u32 %v321, 7
        %v323 = vsub.s32 0, %v322
        %v324 = vrot.slane %v320, %v323
        %v325 = vlaneseq
        %v326 = vshrl.u32 %v325, 7
        %v327 = vsub.s32 4, %v326
        %v328 = vrot.slane %v320, %v327
        %vm329 = vcmp.ne.s16.totalorder %v324, 0
        %vm330 = vcmp.ne.s16.totalorder %v328, 0
        %v331 = vsel %vm329, %v308, 0
        %v332 = vsel %vm330, %v301, 0
        %v333 = vsel %vm329, %v311, 0
        %v334 = vsel %vm330, %v302, 0
        %335 = vrot.lane.b32.xlu0 %v257, 16
        %v336 = vpop.permute.xlu0 %335
        %337 = vrot.lane.b32.xlu0 %v258, 16
        %v338 = vpop.permute.xlu0 %337
        %339 = vrot.lane.b32.xlu0 %v259, 16
        %v340 = vpop.permute.xlu0 %339
        %341 = vrot.lane.b32.xlu0 %v260, 16
        %v342 = vpop.permute.xlu0 %341
        %vm343 = vcmask 130048
        %v344 = vsel %vm343, %v336, %v338
        %v345 = vsel %vm343, %v340, %v342
        %vm348 = vcmask 130048
        %v350 = vsel %vm348, 0, %v336
        %v353 = vsel %vm348, 0, %v340
        %355 = vrot.lane.b32.xlu0 %v257, 15
        %v356 = vpop.permute.xlu0 %355
        %357 = vrot.lane.b32.xlu0 %v258, 15
        %v358 = vpop.permute.xlu0 %357
        %359 = vrot.lane.b32.xlu0 %v259, 15
        %v360 = vpop.permute.xlu0 %359
        %361 = vrot.lane.b32.xlu0 %v260, 15
        %v362 = vpop.permute.xlu0 %361
        %vm363 = vcmask 121856
        %v364 = vsel %vm363, %v356, %v358
        %v365 = vsel %vm363, %v360, %v362
        %vm368 = vcmask 121856
        %v370 = vsel %vm368, 0, %v356
        %v373 = vsel %vm368, 0, %v360
        %vm375 = vcmp.le.s32.totalorder %v286, 14
        %vm376 = vcmp.le.s32.totalorder %v287, 14
        %v377 = vsel %vm375, 1, 0
        %v378 = vsel %vm376, 1, 0
        %vm379 = vcmp.eq.s32.totalorder %v377, 1
        %vm380 = vcmp.eq.s32.totalorder %v378, 1
        %vm381 = vmpackc.low %vm380, %vm379
        %v382 = vsel %vm381, 65537, 0
        %v383 = vlaneseq
        %v384 = vshrl.u32 %v383, 7
        %v385 = vsub.s32 0, %v384
        %v386 = vrot.slane %v382, %v385
        %v387 = vlaneseq
        %v388 = vshrl.u32 %v387, 7
        %v389 = vsub.s32 4, %v388
        %v390 = vrot.slane %v382, %v389
        %vm391 = vcmp.ne.s16.totalorder %v386, 0
        %vm392 = vcmp.ne.s16.totalorder %v390, 0
        %v393 = vsel %vm391, %v370, 0
        %v394 = vsel %vm392, %v364, 0
        %v395 = vsel %vm391, %v373, 0
        %v396 = vsel %vm392, %v365, 0
        %397 = vrot.lane.b32.xlu0 %v257, 1
        %v398 = vpop.permute.xlu0 %397
        %399 = vrot.lane.b32.xlu0 %v258, 1
        %v400 = vpop.permute.xlu0 %399
        %401 = vrot.lane.b32.xlu0 %v259, 1
        %v402 = vpop.permute.xlu0 %401
        %403 = vrot.lane.b32.xlu0 %v260, 1
        %v404 = vpop.permute.xlu0 %403
        %vm405 = vcmask 7168
        %v406 = vsel %vm405, %v398, %v400
        %v407 = vsel %vm405, %v402, %v404
        %vm410 = vcmask 7168
        %v412 = vsel %vm410, 0, %v398
        %v415 = vsel %vm410, 0, %v402
        %v417 = vsel %vm329, %v412, 0
        %v418 = vsel %vm330, %v406, 0
        %v419 = vsel %vm329, %v415, 0
        %v420 = vsel %vm330, %v407, 0
        %421 = vrot.lane.b32.xlu0 %v257, 127
        %v422 = vpop.permute.xlu0 %421
        %423 = vrot.lane.b32.xlu0 %v258, 127
        %v424 = vpop.permute.xlu0 %423
        %425 = vrot.lane.b32.xlu0 %v259, 127
        %v426 = vpop.permute.xlu0 %425
        %427 = vrot.lane.b32.xlu0 %v260, 127
        %v428 = vpop.permute.xlu0 %427
        %vm429 = vcmask 1039360
        %v430 = vsel %vm429, %v422, %v424
        %v431 = vsel %vm429, %v426, %v428
        %vm434 = vcmask 1039360
        %v436 = vsel %vm434, %v424, 0
        %v439 = vsel %vm434, %v428, 0
        %v441 = vsel %vm391, %v430, 0
        %v442 = vsel %vm392, %v436, 0
        %v443 = vsel %vm391, %v431, 0
        %v444 = vsel %vm392, %v439, 0
        %445 = vrot.lane.b32.xlu0 %v257, 113
        %v446 = vpop.permute.xlu0 %445
        %447 = vrot.lane.b32.xlu0 %v258, 113
        %v448 = vpop.permute.xlu0 %447
        %449 = vrot.lane.b32.xlu0 %v259, 113
        %v450 = vpop.permute.xlu0 %449
        %451 = vrot.lane.b32.xlu0 %v260, 113
        %v452 = vpop.permute.xlu0 %451
        %vm453 = vcmask 924672
        %v454 = vsel %vm453, %v446, %v448
        %v455 = vsel %vm453, %v450, %v452
        %vm458 = vcmask 924672
        %v460 = vsel %vm458, %v448, 0
        %v463 = vsel %vm458, %v452, 0
        %v465 = vsel %vm329, %v454, 0
        %v466 = vsel %vm330, %v460, 0
        %v467 = vsel %vm329, %v455, 0
        %v468 = vsel %vm330, %v463, 0
        %469 = vrot.lane.b32.xlu0 %v257, 112
        %v470 = vpop.permute.xlu0 %469
        %471 = vrot.lane.b32.xlu0 %v258, 112
        %v472 = vpop.permute.xlu0 %471
        %473 = vrot.lane.b32.xlu0 %v259, 112
        %v474 = vpop.permute.xlu0 %473
        %475 = vrot.lane.b32.xlu0 %v260, 112
        %v476 = vpop.permute.xlu0 %475
        %vm477 = vcmask 916480
        %v478 = vsel %vm477, %v470, %v472
        %v479 = vsel %vm477, %v474, %v476
        %vm482 = vcmask 916480
        %v484 = vsel %vm482, %v472, 0
        %v487 = vsel %vm482, %v476, 0
        %489 = vrot.lane.b32.xlu0 %v257, 111
        %v490 = vpop.permute.xlu0 %489
        %491 = vrot.lane.b32.xlu0 %v258, 111
        %v492 = vpop.permute.xlu0 %491
        %493 = vrot.lane.b32.xlu0 %v259, 111
        %v494 = vpop.permute.xlu0 %493
        %495 = vrot.lane.b32.xlu0 %v260, 111
        %v496 = vpop.permute.xlu0 %495
        %vm497 = vcmask 908288
        %v498 = vsel %vm497, %v490, %v492
        %v499 = vsel %vm497, %v494, %v496
        %vm502 = vcmask 908288
        %v504 = vsel %vm502, %v492, 0
        %v507 = vsel %vm502, %v496, 0
        %v509 = vsel %vm391, %v498, 0
        %v510 = vsel %vm392, %v504, 0
        %v511 = vsel %vm391, %v499, 0
        %v512 = vsel %vm392, %v507, 0
        %v513 = vld [vmem:[%s2] sm:$0xff]
        %v514 = vld [vmem:[%s2 + $0x8] sm:$0xff]
        %v515 = vld [vmem:[%s2 + $0x10] sm:$0xff]
        %v516 = vld [vmem:[%s2 + $0x18] sm:$0xff]
        %v517 = vld [vmem:[%s2 + $0x20] sm:$0xff]
        %v518 = vld [vmem:[%s2 + $0x28] sm:$0xff]
        %v519 = vld [vmem:[%s2 + $0x30] sm:$0xff]
        %v520 = vld [vmem:[%s2 + $0x38] sm:$0xff]
        %v521 = vld [vmem:[%s2 + $0x40] sm:$0xff]
        %v522 = vld [vmem:[%s2 + $0x48] sm:$0xff]
        %v523 = vld [vmem:[%s2 + $0x50] sm:$0xff]
        %v524 = vld [vmem:[%s2 + $0x58] sm:$0xff]
        %v525 = vld [vmem:[%s1] sm:$0xff]
        %v526 = vld [vmem:[%s1 + $0x8] sm:$0xf]
        %v527 = vld [vmem:[%s1 + $0xc] sm:$0xff]
        %v528 = vld [vmem:[%s1 + $0x14] sm:$0xf]
        %v529 = vld [vmem:[%s1 + $0x18] sm:$0xff]
        %v530 = vld [vmem:[%s1 + $0x20] sm:$0xf]
        %v531 = vld [vmem:[%s1 + $0x24] sm:$0xff]
        %v532 = vld [vmem:[%s1 + $0x2c] sm:$0xf]
        %v533 = vld [vmem:[%s1 + $0x30] sm:$0xff]
        %v534 = vld [vmem:[%s1 + $0x38] sm:$0xf]
        %v535 = vld [vmem:[%s1 + $0x3c] sm:$0xff]
        %v536 = vld [vmem:[%s1 + $0x44] sm:$0xf]
        %v537 = vld [vmem:[%s1 + $0x48] sm:$0xff]
        %v538 = vld [vmem:[%s1 + $0x50] sm:$0xf]
        %v539 = vld [vmem:[%s1 + $0x54] sm:$0xff]
        %v540 = vld [vmem:[%s1 + $0x5c] sm:$0xf]
        %v541 = vld [vmem:[%s1 + $0x60] sm:$0xff]
        %v542 = vld [vmem:[%s1 + $0x68] sm:$0xf]
        %v543 = vld [vmem:[%s1 + $0x6c] sm:$0xff]
        %v544 = vld [vmem:[%s1 + $0x74] sm:$0xf]
        %v545 = vld [vmem:[%s1 + $0x78] sm:$0xff]
        %v546 = vld [vmem:[%s1 + $0x80] sm:$0xf]
        %v547 = vld [vmem:[%s1 + $0x84] sm:$0xff]
        %v548 = vld [vmem:[%s1 + $0x8c] sm:$0xf]
        %550 = vset.pattern.permute.xlu0 0
        %551 = vperm.xlu0 %550, %v513
        %v552 = vpop.permute.xlu0 %551
        %555 = vset.pattern.permute.xlu0 0
        %556 = vperm.xlu0 %555, %v514
        %v557 = vpop.permute.xlu0 %556
        %560 = vset.pattern.permute.xlu0 0
        %561 = vperm.xlu0 %560, %v515
        %v562 = vpop.permute.xlu0 %561
        %565 = vset.pattern.permute.xlu0 0
        %566 = vperm.xlu0 %565, %v516
        %v567 = vpop.permute.xlu0 %566
        %570 = vset.pattern.permute.xlu0 0
        %571 = vperm.xlu0 %570, %v517
        %v572 = vpop.permute.xlu0 %571
        %575 = vset.pattern.permute.xlu0 0
        %576 = vperm.xlu0 %575, %v518
        %v577 = vpop.permute.xlu0 %576
        %580 = vset.pattern.permute.xlu0 0
        %581 = vperm.xlu0 %580, %v519
        %v582 = vpop.permute.xlu0 %581
        %585 = vset.pattern.permute.xlu0 0
        %586 = vperm.xlu0 %585, %v520
        %v587 = vpop.permute.xlu0 %586
        %590 = vset.pattern.permute.xlu0 0
        %591 = vperm.xlu0 %590, %v521
        %v592 = vpop.permute.xlu0 %591
        %595 = vset.pattern.permute.xlu0 0
        %596 = vperm.xlu0 %595, %v522
        %v597 = vpop.permute.xlu0 %596
        %600 = vset.pattern.permute.xlu0 0
        %601 = vperm.xlu0 %600, %v523
        %v602 = vpop.permute.xlu0 %601
        %605 = vset.pattern.permute.xlu0 0
        %606 = vperm.xlu0 %605, %v524
        %v607 = vpop.permute.xlu0 %606
        %v633 = vunpack.c.l.b16 %v525
        %v634 = vunpack.c.h.b16 %v525
        %v635 = vunpack.c.l.b16 %v526
        %v636 = vunpack.c.l.b16 %v527
        %v637 = vunpack.c.h.b16 %v527
        %v638 = vunpack.c.l.b16 %v528
        %v639 = vunpack.c.l.b16 %v529
        %v640 = vunpack.c.h.b16 %v529
        %v641 = vunpack.c.l.b16 %v530
        %v642 = vunpack.c.l.b16 %v531
        %v643 = vunpack.c.h.b16 %v531
        %v644 = vunpack.c.l.b16 %v532
        %v645 = vunpack.c.l.b16 %v533
        %v646 = vunpack.c.h.b16 %v533
        %v647 = vunpack.c.l.b16 %v534
        %v648 = vunpack.c.l.b16 %v535
        %v649 = vunpack.c.h.b16 %v535
        %v650 = vunpack.c.l.b16 %v536
        %v651 = vunpack.c.l.b16 %v537
        %v652 = vunpack.c.h.b16 %v537
        %v653 = vunpack.c.l.b16 %v538
        %v654 = vunpack.c.l.b16 %v539
        %v655 = vunpack.c.h.b16 %v539
        %v656 = vunpack.c.l.b16 %v540
        %v657 = vunpack.c.l.b16 %v541
        %v658 = vunpack.c.h.b16 %v541
        %v659 = vunpack.c.l.b16 %v542
        %v660 = vunpack.c.l.b16 %v543
        %v661 = vunpack.c.h.b16 %v543
        %v662 = vunpack.c.l.b16 %v544
        %v663 = vunpack.c.l.b16 %v545
        %v664 = vunpack.c.h.b16 %v545
        %v665 = vunpack.c.l.b16 %v546
        %v666 = vunpack.c.l.b16 %v547
        %v667 = vunpack.c.h.b16 %v547
        %v668 = vunpack.c.l.b16 %v548
        %v669 = vpack.c.b16 %v636, %v633
        %v670 = vpack.c.b16 %v637, %v634
        %v671 = vpack.c.b16 %v638, %v635
        %v672 = vpack.c.b16 %v642, %v639
        %v673 = vpack.c.b16 %v643, %v640
        %v674 = vpack.c.b16 %v644, %v641
        %v675 = vpack.c.b16 %v648, %v645
        %v676 = vpack.c.b16 %v649, %v646
        %v677 = vpack.c.b16 %v650, %v647
        %v678 = vpack.c.b16 %v654, %v651
        %v679 = vpack.c.b16 %v655, %v652
        %v680 = vpack.c.b16 %v656, %v653
        %v681 = vpack.c.b16 %v660, %v657
        %v682 = vpack.c.b16 %v661, %v658
        %v683 = vpack.c.b16 %v662, %v659
        %v684 = vpack.c.b16 %v666, %v663
        %v685 = vpack.c.b16 %v667, %v664
        %v686 = vpack.c.b16 %v668, %v665
        %vm699 = vcmask 261120
        %v701 = vsel %vm699, %v671, 0
        %v704 = vsel %vm699, %v674, 0
        %v707 = vsel %vm699, %v677, 0
        %v710 = vsel %vm699, %v680, 0
        %v713 = vsel %vm699, %v683, 0
        %v716 = vsel %vm699, %v686, 0
        %718 = vmatprep.subr.bf16.mxu0 %v420
        %719 = vmatpush1.bf16.msra.mxu0 %v419
        %720 = vmatprep.subr.bf16.mxu0 %v418
        %721 = vmatpush1.bf16.msra.mxu0 %v417
        %722 = vmatprep.subr.bf16.mxu0 %v396
        %723 = vmatpush1.bf16.msra.mxu0 %v395
        %724 = vmatprep.subr.bf16.mxu0 %v394
        %725 = vmatpush1.bf16.msra.mxu0 %v393
        %726 = vmatprep.subr.bf16.mxu0 %v345
        %727 = vmatpush1.bf16.msra.mxu0 %v353
        %728 = vmatprep.subr.bf16.mxu0 %v344
        %729 = vmatpush1.bf16.msra.mxu0 %v350
        %730 = vmatprep.subr.bf16.mxu0 %v334
        %731 = vmatpush1.bf16.msra.mxu0 %v333
        %732 = vmatprep.subr.bf16.mxu0 %v332
        %733 = vmatpush1.bf16.msra.mxu0 %v331
        %734 = vmatprep.subr.bf16.mxu0 %v487
        %735 = vmatpush2.bf16.msra.mxu0 %v479
        %736 = vmatprep.subr.bf16.mxu0 %v484
        %737 = vmatpush2.bf16.msra.mxu0 %v478
        %738 = vmatprep.subr.bf16.mxu0 %v468
        %739 = vmatpush2.bf16.msra.mxu0 %v467
        %740 = vmatprep.subr.bf16.mxu0 %v466
        %741 = vmatpush2.bf16.msra.mxu0 %v465
        %742 = vmatprep.subr.bf16.mxu0 %v444
        %743 = vmatpush2.bf16.msra.mxu0 %v443
        %744 = vmatprep.subr.bf16.mxu0 %v442
        %745 = vmatpush2.bf16.msra.mxu0 %v441
        %746 = vmatprep.subr.bf16.mxu0 %v260
        %747 = vmatpush2.bf16.msra.mxu0 %v259
        %748 = vmatprep.subr.bf16.mxu0 %v258
        %749 = vmatpush2.bf16.msra.mxu0 %v257
        %750 = vmatprep.mubr.bf16.mxu0 %v670
        %751 = vmatmul.mubr.bf16.gmra.mxu0 %v669
        %v752 = vpop.f32.mrf.mxu0
        %v753 = vadd.f32 %v552, %v752
        %v754 = vpop.f32.mrf.mxu0
        %v755 = vadd.f32 %v552, %v754
        %v756 = vpop.f32.mrf.mxu0
        %v757 = vadd.f32 %v557, %v756
        %v758 = vpop.f32.mrf.mxu0
        %v759 = vadd.f32 %v557, %v758
        %760 = vmatprep.mubr.bf16.mxu0 %v673
        %761 = vmatmul.mubr.bf16.gmra.mxu0 %v672
        %v762 = vpop.f32.mrf.mxu0
        %v763 = vadd.f32 %v562, %v762
        %v764 = vpop.f32.mrf.mxu0
        %v765 = vadd.f32 %v562, %v764
        %v766 = vpop.f32.mrf.mxu0
        %v767 = vadd.f32 %v567, %v766
        %v768 = vpop.f32.mrf.mxu0
        %v769 = vadd.f32 %v567, %v768
        %770 = vmatprep.mubr.bf16.mxu0 %v676
        %771 = vmatmul.mubr.bf16.gmra.mxu0 %v675
        %v772 = vpop.f32.mrf.mxu0
        %v773 = vadd.f32 %v572, %v772
        %v774 = vpop.f32.mrf.mxu0
        %v775 = vadd.f32 %v572, %v774
        %v776 = vpop.f32.mrf.mxu0
        %v777 = vadd.f32 %v577, %v776
        %v778 = vpop.f32.mrf.mxu0
        %v779 = vadd.f32 %v577, %v778
        %780 = vmatprep.mubr.bf16.mxu0 %v679
        %781 = vmatmul.mubr.bf16.gmra.mxu0 %v678
        %v782 = vpop.f32.mrf.mxu0
        %v783 = vadd.f32 %v582, %v782
        %v784 = vpop.f32.mrf.mxu0
        %v785 = vadd.f32 %v582, %v784
        %v786 = vpop.f32.mrf.mxu0
        %v787 = vadd.f32 %v587, %v786
        %v788 = vpop.f32.mrf.mxu0
        %v789 = vadd.f32 %v587, %v788
        %790 = vmatprep.mubr.bf16.mxu0 %v682
        %791 = vmatmul.mubr.bf16.gmra.mxu0 %v681
        %v792 = vpop.f32.mrf.mxu0
        %v793 = vadd.f32 %v592, %v792
        %v794 = vpop.f32.mrf.mxu0
        %v795 = vadd.f32 %v592, %v794
        %v796 = vpop.f32.mrf.mxu0
        %v797 = vadd.f32 %v597, %v796
        %v798 = vpop.f32.mrf.mxu0
        %v799 = vadd.f32 %v597, %v798
        %800 = vmatprep.mubr.bf16.mxu0 %v685
        %801 = vmatmul.mubr.bf16.gmra.mxu0 %v684
        %v802 = vpop.f32.mrf.mxu0
        %v803 = vadd.f32 %v602, %v802
        %v804 = vpop.f32.mrf.mxu0
        %v805 = vadd.f32 %v602, %v804
        %v806 = vpop.f32.mrf.mxu0
        %v807 = vadd.f32 %v607, %v806
        %v808 = vpop.f32.mrf.mxu0
        %v809 = vadd.f32 %v607, %v808
        %810 = vdwg.mxu0
        %811 = vmatprep.subr.bf16.mxu0 0
        %812 = vmatpush1.bf16.msra.mxu0 0
        %813 = vmatprep.subr.bf16.mxu0 0
        %814 = vmatpush1.bf16.msra.mxu0 0
        %815 = vmatprep.subr.bf16.mxu0 0
        %816 = vmatpush1.bf16.msra.mxu0 0
        %817 = vmatprep.subr.bf16.mxu0 0
        %818 = vmatpush1.bf16.msra.mxu0 0
        %819 = vmatprep.subr.bf16.mxu0 0
        %820 = vmatpush1.bf16.msra.mxu0 0
        %821 = vmatprep.subr.bf16.mxu0 0
        %822 = vmatpush1.bf16.msra.mxu0 0
        %823 = vmatprep.subr.bf16.mxu0 %v512
        %824 = vmatpush1.bf16.msra.mxu0 %v511
        %825 = vmatprep.subr.bf16.mxu0 %v510
        %826 = vmatpush1.bf16.msra.mxu0 %v509
        %827 = vmatprep.subr.bf16.mxu0 0
        %828 = vmatpush2.bf16.msra.mxu0 0
        %829 = vmatprep.subr.bf16.mxu0 0
        %830 = vmatpush2.bf16.msra.mxu0 0
        %831 = vmatprep.subr.bf16.mxu0 0
        %832 = vmatpush2.bf16.msra.mxu0 0
        %833 = vmatprep.subr.bf16.mxu0 0
        %834 = vmatpush2.bf16.msra.mxu0 0
        %835 = vmatprep.subr.bf16.mxu0 0
        %836 = vmatpush2.bf16.msra.mxu0 0
        %837 = vmatprep.subr.bf16.mxu0 0
        %838 = vmatpush2.bf16.msra.mxu0 0
        %839 = vmatprep.subr.bf16.mxu0 0
        %840 = vmatpush2.bf16.msra.mxu0 0
        %841 = vmatprep.subr.bf16.mxu0 0
        %842 = vmatpush2.bf16.msra.mxu0 0
        %843 = vmatprep.mubr.bf16.mxu0 0
        %844 = vmatmul.mubr.bf16.gmra.mxu0 %v701
        %v845 = vpop.f32.mrf.mxu0
        %v846 = vadd.f32 %v753, %v845
        %v847 = vpop.f32.mrf.mxu0
        %v848 = vadd.f32 %v755, %v847
        %v849 = vpop.f32.mrf.mxu0
        %v850 = vadd.f32 %v757, %v849
        %v851 = vpop.f32.mrf.mxu0
        %v852 = vadd.f32 %v759, %v851
        %853 = vmatprep.mubr.bf16.mxu0 0
        %854 = vmatmul.mubr.bf16.gmra.mxu0 %v704
        %v855 = vpop.f32.mrf.mxu0
        %v856 = vadd.f32 %v763, %v855
        %v857 = vpop.f32.mrf.mxu0
        %v858 = vadd.f32 %v765, %v857
        %v859 = vpop.f32.mrf.mxu0
        %v860 = vadd.f32 %v767, %v859
        %v861 = vpop.f32.mrf.mxu0
        %v862 = vadd.f32 %v769, %v861
        %863 = vmatprep.mubr.bf16.mxu0 0
        %864 = vmatmul.mubr.bf16.gmra.mxu0 %v707
        %v865 = vpop.f32.mrf.mxu0
        %v866 = vadd.f32 %v773, %v865
        %v867 = vpop.f32.mrf.mxu0
        %v868 = vadd.f32 %v775, %v867
        %v869 = vpop.f32.mrf.mxu0
        %v870 = vadd.f32 %v777, %v869
        %v871 = vpop.f32.mrf.mxu0
        %v872 = vadd.f32 %v779, %v871
        %873 = vmatprep.mubr.bf16.mxu0 0
        %874 = vmatmul.mubr.bf16.gmra.mxu0 %v710
        %v875 = vpop.f32.mrf.mxu0
        %v876 = vadd.f32 %v783, %v875
        %v877 = vpop.f32.mrf.mxu0
        %v878 = vadd.f32 %v785, %v877
        %v879 = vpop.f32.mrf.mxu0
        %v880 = vadd.f32 %v787, %v879
        %v881 = vpop.f32.mrf.mxu0
        %v882 = vadd.f32 %v789, %v881
        %883 = vmatprep.mubr.bf16.mxu0 0
        %884 = vmatmul.mubr.bf16.gmra.mxu0 %v713
        %v885 = vpop.f32.mrf.mxu0
        %v886 = vadd.f32 %v793, %v885
        %v887 = vpop.f32.mrf.mxu0
        %v888 = vadd.f32 %v795, %v887
        %v889 = vpop.f32.mrf.mxu0
        %v890 = vadd.f32 %v797, %v889
        %v891 = vpop.f32.mrf.mxu0
        %v892 = vadd.f32 %v799, %v891
        %893 = vmatprep.mubr.bf16.mxu0 0
        %894 = vmatmul.mubr.bf16.gmra.mxu0 %v716
        %v895 = vpop.f32.mrf.mxu0
        %v896 = vadd.f32 %v803, %v895
        %v897 = vpop.f32.mrf.mxu0
        %v898 = vadd.f32 %v805, %v897
        %v899 = vpop.f32.mrf.mxu0
        %v900 = vadd.f32 %v807, %v899
        %v901 = vpop.f32.mrf.mxu0
        %v902 = vadd.f32 %v809, %v901
        %903 = vdwg.mxu0
        %v904 = vadd.f32 %v846, %v848
        %905 = vadd.xlane.f32.xlu0 %v904
        %v906 = vpop.xlane.xlu0 %905
        %v907 = vadd.f32 %v850, %v852
        %908 = vadd.xlane.f32.xlu0 %v907
        %v909 = vpop.xlane.xlu0 %908
        %v910 = vadd.f32 %v856, %v858
        %911 = vadd.xlane.f32.xlu0 %v910
        %v912 = vpop.xlane.xlu0 %911
        %v913 = vadd.f32 %v860, %v862
        %914 = vadd.xlane.f32.xlu0 %v913
        %v915 = vpop.xlane.xlu0 %914
        %v916 = vadd.f32 %v866, %v868
        %917 = vadd.xlane.f32.xlu0 %v916
        %v918 = vpop.xlane.xlu0 %917
        %v919 = vadd.f32 %v870, %v872
        %920 = vadd.xlane.f32.xlu0 %v919
        %v921 = vpop.xlane.xlu0 %920
        %v922 = vadd.f32 %v876, %v878
        %923 = vadd.xlane.f32.xlu0 %v922
        %v924 = vpop.xlane.xlu0 %923
        %v925 = vadd.f32 %v880, %v882
        %926 = vadd.xlane.f32.xlu0 %v925
        %v927 = vpop.xlane.xlu0 %926
        %v928 = vadd.f32 %v886, %v888
        %929 = vadd.xlane.f32.xlu0 %v928
        %v930 = vpop.xlane.xlu0 %929
        %v931 = vadd.f32 %v890, %v892
        %932 = vadd.xlane.f32.xlu0 %v931
        %v933 = vpop.xlane.xlu0 %932
        %v934 = vadd.f32 %v896, %v898
        %935 = vadd.xlane.f32.xlu0 %v934
        %v936 = vpop.xlane.xlu0 %935
        %v937 = vadd.f32 %v900, %v902
        %938 = vadd.xlane.f32.xlu0 %v937
        %v939 = vpop.xlane.xlu0 %938
        %v940 = vmul.f32 %v846, %v846
        %v941 = vmul.f32 %v848, %v848
        %v942 = vmul.f32 %v850, %v850
        %v943 = vmul.f32 %v852, %v852
        %v944 = vmul.f32 %v856, %v856
        %v945 = vmul.f32 %v858, %v858
        %v946 = vmul.f32 %v860, %v860
        %v947 = vmul.f32 %v862, %v862
        %v948 = vmul.f32 %v866, %v866
        %v949 = vmul.f32 %v868, %v868
        %v950 = vmul.f32 %v870, %v870
        %v951 = vmul.f32 %v872, %v872
        %v952 = vmul.f32 %v876, %v876
        %v953 = vmul.f32 %v878, %v878
        %v954 = vmul.f32 %v880, %v880
        %v955 = vmul.f32 %v882, %v882
        %v956 = vmul.f32 %v886, %v886
        %v957 = vmul.f32 %v888, %v888
        %v958 = vmul.f32 %v890, %v890
        %v959 = vmul.f32 %v892, %v892
        %v960 = vmul.f32 %v896, %v896
        %v961 = vmul.f32 %v898, %v898
        %v962 = vmul.f32 %v900, %v900
        %v963 = vmul.f32 %v902, %v902
        %v964 = vadd.f32 %v940, %v941
        %965 = vadd.xlane.f32.xlu0 %v964
        %v966 = vpop.xlane.xlu0 %965
        %v967 = vadd.f32 %v942, %v943
        %968 = vadd.xlane.f32.xlu0 %v967
        %v969 = vpop.xlane.xlu0 %968
        %v970 = vadd.f32 %v944, %v945
        %971 = vadd.xlane.f32.xlu0 %v970
        %v972 = vpop.xlane.xlu0 %971
        %v973 = vadd.f32 %v946, %v947
        %974 = vadd.xlane.f32.xlu0 %v973
        %v975 = vpop.xlane.xlu0 %974
        %v976 = vadd.f32 %v948, %v949
        %977 = vadd.xlane.f32.xlu0 %v976
        %v978 = vpop.xlane.xlu0 %977
        %v979 = vadd.f32 %v950, %v951
        %980 = vadd.xlane.f32.xlu0 %v979
        %v981 = vpop.xlane.xlu0 %980
        %v982 = vadd.f32 %v952, %v953
        %983 = vadd.xlane.f32.xlu0 %v982
        %v984 = vpop.xlane.xlu0 %983
        %v985 = vadd.f32 %v954, %v955
        %986 = vadd.xlane.f32.xlu0 %v985
        %v987 = vpop.xlane.xlu0 %986
        %v988 = vadd.f32 %v956, %v957
        %989 = vadd.xlane.f32.xlu0 %v988
        %v990 = vpop.xlane.xlu0 %989
        %v991 = vadd.f32 %v958, %v959
        %992 = vadd.xlane.f32.xlu0 %v991
        %v993 = vpop.xlane.xlu0 %992
        %v994 = vadd.f32 %v960, %v961
        %995 = vadd.xlane.f32.xlu0 %v994
        %v996 = vpop.xlane.xlu0 %995
        %v997 = vadd.f32 %v962, %v963
        %998 = vadd.xlane.f32.xlu0 %v997
        %v999 = vpop.xlane.xlu0 %998
        %v1000 = vsel %vm410, %v906, %v966
        %v1001 = vsel %vm410, %v909, %v969
        %v1002 = vsel %vm410, %v912, %v972
        %v1003 = vsel %vm410, %v915, %v975
        %v1004 = vsel %vm410, %v918, %v978
        %v1005 = vsel %vm410, %v921, %v981
        %v1006 = vsel %vm410, %v924, %v984
        %v1007 = vsel %vm410, %v927, %v987
        %v1008 = vsel %vm410, %v930, %v990
        %v1009 = vsel %vm410, %v933, %v993
        %v1010 = vsel %vm410, %v936, %v996
        %v1011 = vsel %vm410, %v939, %v999
        %v1012 = vld [vmem:[%s3] sm:$0xff]
        %v1013 = vld [vmem:[%s3 + $0x8] sm:$0xff]
        %v1014 = vld [vmem:[%s3 + $0x10] sm:$0xff]
        %v1015 = vld [vmem:[%s3 + $0x18] sm:$0xff]
        %v1016 = vld [vmem:[%s3 + $0x20] sm:$0xff]
        %v1017 = vld [vmem:[%s3 + $0x28] sm:$0xff]
        %vm1018 = vcmask 785408
        %v1020 = vsel %vm1018, %v1012, 0
        %v1023 = vsel %vm1018, %v1013, 0
        %v1026 = vsel %vm1018, %v1014, 0
        %v1029 = vsel %vm1018, %v1015, 0
        %v1032 = vsel %vm1018, %v1016, 0
        %v1035 = vsel %vm1018, %v1017, 0
        %1037 = vmatprep.subr.mxu0 0.0
        %1038 = vmatpush1.msra.mxu0 0.0
        %1039 = vmatprep.subr.mxu0 0.0
        %1040 = vmatpush1.msra.mxu0 0.0
        %1041 = vmatprep.subr.mxu0 0.0
        %1042 = vmatpush1.msra.mxu0 0.0
        %1043 = vmatprep.subr.mxu0 0.0
        %1044 = vmatpush1.msra.mxu0 0.0
        %1045 = vmatprep.subr.mxu0 0.0
        %1046 = vmatpush1.msra.mxu0 %v1011
        %1047 = vmatprep.subr.mxu0 0.0
        %1048 = vmatpush1.msra.mxu0 %v1010
        %1049 = vmatprep.subr.mxu0 0.0
        %1050 = vmatpush1.msra.mxu0 %v1009
        %1051 = vmatprep.subr.mxu0 0.0
        %1052 = vmatpush1.msra.mxu0 %v1008
        %1053 = vmatprep.subr.mxu0 0.0
        %1054 = vmatpush1.msra.mxu0 %v1007
        %1055 = vmatprep.subr.mxu0 0.0
        %1056 = vmatpush1.msra.mxu0 %v1006
        %1057 = vmatprep.subr.mxu0 0.0
        %1058 = vmatpush1.msra.mxu0 %v1005
        %1059 = vmatprep.subr.mxu0 0.0
        %1060 = vmatpush1.msra.mxu0 %v1004
        %1061 = vmatprep.subr.mxu0 0.0
        %1062 = vmatpush1.msra.mxu0 %v1003
        %1063 = vmatprep.subr.mxu0 0.0
        %1064 = vmatpush1.msra.mxu0 %v1002
        %1065 = vmatprep.subr.mxu0 0.0
        %1066 = vmatpush1.msra.mxu0 %v1001
        %1067 = vmatprep.subr.mxu0 0.0
        %1068 = vmatpush1.msra.mxu0 %v1000
        %1069 = vmatprep.subr.mxu0 0.0
        %1070 = vmatpush2.msra.mxu0 0.0
        %1071 = vmatprep.subr.mxu0 0.0
        %1072 = vmatpush2.msra.mxu0 0.0
        %1073 = vmatprep.subr.mxu0 0.0
        %1074 = vmatpush2.msra.mxu0 0.0
        %1075 = vmatprep.subr.mxu0 0.0
        %1076 = vmatpush2.msra.mxu0 0.0
        %1077 = vmatprep.subr.mxu0 0.0
        %1078 = vmatpush2.msra.mxu0 0.0
        %1079 = vmatprep.subr.mxu0 0.0
        %1080 = vmatpush2.msra.mxu0 0.0
        %1081 = vmatprep.subr.mxu0 0.0
        %1082 = vmatpush2.msra.mxu0 0.0
        %1083 = vmatprep.subr.mxu0 0.0
        %1084 = vmatpush2.msra.mxu0 0.0
        %1085 = vmatprep.subr.mxu0 0.0
        %1086 = vmatpush2.msra.mxu0 0.0
        %1087 = vmatprep.subr.mxu0 0.0
        %1088 = vmatpush2.msra.mxu0 0.0
        %1089 = vmatprep.subr.mxu0 0.0
        %1090 = vmatpush2.msra.mxu0 0.0
        %1091 = vmatprep.subr.mxu0 0.0
        %1092 = vmatpush2.msra.mxu0 0.0
        %1093 = vmatprep.subr.mxu0 0.0
        %1094 = vmatpush2.msra.mxu0 0.0
        %1095 = vmatprep.subr.mxu0 0.0
        %1096 = vmatpush2.msra.mxu0 0.0
        %1097 = vmatprep.subr.mxu0 0.0
        %1098 = vmatpush2.msra.mxu0 0.0
        %1099 = vmatprep.subr.mxu0 0.0
        %1100 = vmatpush2.msra.mxu0 0.0
        %1101 = vmatprep.mubr.f32.mxu0 0.0
        %1102 = vmatmul.mubr.f32.gmra.mxu0 %v1020
        %v1103 = vpop.f32.mrf.mxu0
        %v1104 = vadd.f32 0.0, %v1103
        %v1105 = vpop.f32.mrf.mxu0
        %1106 = vmatprep.mubr.f32.mxu0 0.0
        %1107 = vmatmul.mubr.f32.gmra.mxu0 %v1023
        %v1108 = vpop.f32.mrf.mxu0
        %v1109 = vadd.f32 0.0, %v1108
        %v1110 = vpop.f32.mrf.mxu0
        %1111 = vmatprep.mubr.f32.mxu0 0.0
        %1112 = vmatmul.mubr.f32.gmra.mxu0 %v1026
        %v1113 = vpop.f32.mrf.mxu0
        %v1114 = vadd.f32 0.0, %v1113
        %v1115 = vpop.f32.mrf.mxu0
        %1116 = vmatprep.mubr.f32.mxu0 0.0
        %1117 = vmatmul.mubr.f32.gmra.mxu0 %v1029
        %v1118 = vpop.f32.mrf.mxu0
        %v1119 = vadd.f32 0.0, %v1118
        %v1120 = vpop.f32.mrf.mxu0
        %1121 = vmatprep.mubr.f32.mxu0 0.0
        %1122 = vmatmul.mubr.f32.gmra.mxu0 %v1032
        %v1123 = vpop.f32.mrf.mxu0
        %v1124 = vadd.f32 0.0, %v1123
        %v1125 = vpop.f32.mrf.mxu0
        %1126 = vmatprep.mubr.f32.mxu0 0.0
        %1127 = vmatmul.mubr.f32.gmra.mxu0 %v1035
        %v1128 = vpop.f32.mrf.mxu0
        %v1129 = vadd.f32 0.0, %v1128
        %v1130 = vpop.f32.mrf.mxu0
        %1131 = vdwg.mxu0
        %v1132 = vrcp.pop 512.0
        %v1133 = vmul.f32 %v1104, %v1132
        %v1134 = vmul.f32 %v1109, %v1132
        %v1135 = vmul.f32 %v1114, %v1132
        %v1136 = vmul.f32 %v1119, %v1132
        %v1137 = vmul.f32 %v1124, %v1132
        %v1138 = vmul.f32 %v1129, %v1132
        %v1139 = vmul.f32 %v1133, %v1133
        %v1140 = vmul.f32 %v1134, %v1134
        %v1141 = vmul.f32 %v1135, %v1135
        %v1142 = vmul.f32 %v1136, %v1136
        %v1143 = vmul.f32 %v1137, %v1137
        %v1144 = vmul.f32 %v1138, %v1138
        %1151 = vrot.lane.b32.xlu0 %v1139, 1
        %v1152 = vpop.permute.xlu0 %1151
        %1153 = vrot.lane.b32.xlu0 %v1140, 1
        %v1154 = vpop.permute.xlu0 %1153
        %1155 = vrot.lane.b32.xlu0 %v1141, 1
        %v1156 = vpop.permute.xlu0 %1155
        %1157 = vrot.lane.b32.xlu0 %v1142, 1
        %v1158 = vpop.permute.xlu0 %1157
        %1159 = vrot.lane.b32.xlu0 %v1143, 1
        %v1160 = vpop.permute.xlu0 %1159
        %1161 = vrot.lane.b32.xlu0 %v1144, 1
        %v1162 = vpop.permute.xlu0 %1161
        %v1169 = vsub.f32 %v1133, %v1152
        %v1170 = vsub.f32 %v1134, %v1154
        %v1171 = vsub.f32 %v1135, %v1156
        %v1172 = vsub.f32 %v1136, %v1158
        %v1173 = vsub.f32 %v1137, %v1160
        %v1174 = vsub.f32 %v1138, %v1162
        %v1175 = vadd.f32 %v1169, 1e-05
        %v1176 = vadd.f32 %v1170, 1e-05
        %v1177 = vadd.f32 %v1171, 1e-05
        %v1178 = vadd.f32 %v1172, 1e-05
        %v1179 = vadd.f32 %v1173, 1e-05
        %v1180 = vadd.f32 %v1174, 1e-05
        %v1181 = vrsqrt.pop %v1175
        %v1182 = vrsqrt.pop %v1176
        %v1183 = vrsqrt.pop %v1177
        %v1184 = vrsqrt.pop %v1178
        %v1185 = vrsqrt.pop %v1179
        %v1186 = vrsqrt.pop %v1180
        %v1187 = vsel %vm410, %v1133, %v1181
        %v1188 = vsel %vm410, %v1134, %v1182
        %v1189 = vsel %vm410, %v1135, %v1183
        %v1190 = vsel %vm410, %v1136, %v1184
        %v1191 = vsel %vm410, %v1137, %v1185
        %v1192 = vsel %vm410, %v1138, %v1186
        %v1193 = vld [vmem:[%s4] sm:$0xff]
        %v1194 = vld [vmem:[%s4 + $0x8] sm:$0xff]
        %v1195 = vld [vmem:[%s4 + $0x10] sm:$0xff]
        %v1196 = vld [vmem:[%s4 + $0x18] sm:$0xff]
        %v1197 = vld [vmem:[%s4 + $0x20] sm:$0xff]
        %v1198 = vld [vmem:[%s4 + $0x28] sm:$0xff]
        %v1199 = vld [vmem:[%s4 + $0x30] sm:$0xff]
        %v1200 = vld [vmem:[%s4 + $0x38] sm:$0xff]
        %v1201 = vld [vmem:[%s4 + $0x40] sm:$0xff]
        %v1202 = vld [vmem:[%s4 + $0x48] sm:$0xff]
        %v1203 = vld [vmem:[%s4 + $0x50] sm:$0xff]
        %v1204 = vld [vmem:[%s4 + $0x58] sm:$0xff]
        %vm1205 = vcmask 392192
        %v1207 = vsel %vm1205, %v1193, 0
        %v1210 = vsel %vm1205, %v1194, 0
        %v1213 = vsel %vm1205, %v1195, 0
        %v1216 = vsel %vm1205, %v1196, 0
        %v1219 = vsel %vm1205, %v1197, 0
        %v1222 = vsel %vm1205, %v1198, 0
        %v1225 = vsel %vm1205, %v1199, 0
        %v1228 = vsel %vm1205, %v1200, 0
        %v1231 = vsel %vm1205, %v1201, 0
        %v1234 = vsel %vm1205, %v1202, 0
        %v1237 = vsel %vm1205, %v1203, 0
        %v1240 = vsel %vm1205, %v1204, 0
        %1242 = vmatprep.subr.mxu0 0.0
        %1243 = vmatpush1.msra.mxu0 0.0
        %1244 = vmatprep.subr.mxu0 0.0
        %1245 = vmatpush1.msra.mxu0 0.0
        %1246 = vmatprep.subr.mxu0 0.0
        %1247 = vmatpush1.msra.mxu0 0.0
        %1248 = vmatprep.subr.mxu0 0.0
        %1249 = vmatpush1.msra.mxu0 0.0
        %1250 = vmatprep.subr.mxu0 0.0
        %1251 = vmatpush1.msra.mxu0 0.0
        %1252 = vmatprep.subr.mxu0 0.0
        %1253 = vmatpush1.msra.mxu0 0.0
        %1254 = vmatprep.subr.mxu0 0.0
        %1255 = vmatpush1.msra.mxu0 0.0
        %1256 = vmatprep.subr.mxu0 0.0
        %1257 = vmatpush1.msra.mxu0 0.0
        %1258 = vmatprep.subr.mxu0 0.0
        %1259 = vmatpush1.msra.mxu0 0.0
        %1260 = vmatprep.subr.mxu0 0.0
        %1261 = vmatpush1.msra.mxu0 0.0
        %1262 = vmatprep.subr.mxu0 0.0
        %1263 = vmatpush1.msra.mxu0 %v1192
        %1264 = vmatprep.subr.mxu0 0.0
        %1265 = vmatpush1.msra.mxu0 %v1191
        %1266 = vmatprep.subr.mxu0 0.0
        %1267 = vmatpush1.msra.mxu0 %v1190
        %1268 = vmatprep.subr.mxu0 0.0
        %1269 = vmatpush1.msra.mxu0 %v1189
        %1270 = vmatprep.subr.mxu0 0.0
        %1271 = vmatpush1.msra.mxu0 %v1188
        %1272 = vmatprep.subr.mxu0 0.0
        %1273 = vmatpush1.msra.mxu0 %v1187
        %1274 = vmatprep.subr.mxu0 0.0
        %1275 = vmatpush2.msra.mxu0 0.0
        %1276 = vmatprep.subr.mxu0 0.0
        %1277 = vmatpush2.msra.mxu0 0.0
        %1278 = vmatprep.subr.mxu0 0.0
        %1279 = vmatpush2.msra.mxu0 0.0
        %1280 = vmatprep.subr.mxu0 0.0
        %1281 = vmatpush2.msra.mxu0 0.0
        %1282 = vmatprep.subr.mxu0 0.0
        %1283 = vmatpush2.msra.mxu0 0.0
        %1284 = vmatprep.subr.mxu0 0.0
        %1285 = vmatpush2.msra.mxu0 0.0
        %1286 = vmatprep.subr.mxu0 0.0
        %1287 = vmatpush2.msra.mxu0 0.0
        %1288 = vmatprep.subr.mxu0 0.0
        %1289 = vmatpush2.msra.mxu0 0.0
        %1290 = vmatprep.subr.mxu0 0.0
        %1291 = vmatpush2.msra.mxu0 0.0
        %1292 = vmatprep.subr.mxu0 0.0
        %1293 = vmatpush2.msra.mxu0 0.0
        %1294 = vmatprep.subr.mxu0 0.0
        %1295 = vmatpush2.msra.mxu0 0.0
        %1296 = vmatprep.subr.mxu0 0.0
        %1297 = vmatpush2.msra.mxu0 0.0
        %1298 = vmatprep.subr.mxu0 0.0
        %1299 = vmatpush2.msra.mxu0 0.0
        %1300 = vmatprep.subr.mxu0 0.0
        %1301 = vmatpush2.msra.mxu0 0.0
        %1302 = vmatprep.subr.mxu0 0.0
        %1303 = vmatpush2.msra.mxu0 0.0
        %1304 = vmatprep.subr.mxu0 0.0
        %1305 = vmatpush2.msra.mxu0 0.0
        %1306 = vmatprep.mubr.f32.mxu0 0.0
        %1307 = vmatmul.mubr.f32.gmra.mxu0 %v1207
        %v1308 = vpop.f32.mrf.mxu0
        %v1309 = vadd.f32 0.0, %v1308
        %v1310 = vpop.f32.mrf.mxu0
        %1311 = vmatprep.mubr.f32.mxu0 0.0
        %1312 = vmatmul.mubr.f32.gmra.mxu0 %v1210
        %v1313 = vpop.f32.mrf.mxu0
        %v1314 = vadd.f32 0.0, %v1313
        %v1315 = vpop.f32.mrf.mxu0
        %1316 = vmatprep.mubr.f32.mxu0 0.0
        %1317 = vmatmul.mubr.f32.gmra.mxu0 %v1213
        %v1318 = vpop.f32.mrf.mxu0
        %v1319 = vadd.f32 0.0, %v1318
        %v1320 = vpop.f32.mrf.mxu0
        %1321 = vmatprep.mubr.f32.mxu0 0.0
        %1322 = vmatmul.mubr.f32.gmra.mxu0 %v1216
        %v1323 = vpop.f32.mrf.mxu0
        %v1324 = vadd.f32 0.0, %v1323
        %v1325 = vpop.f32.mrf.mxu0
        %1326 = vmatprep.mubr.f32.mxu0 0.0
        %1327 = vmatmul.mubr.f32.gmra.mxu0 %v1219
        %v1328 = vpop.f32.mrf.mxu0
        %v1329 = vadd.f32 0.0, %v1328
        %v1330 = vpop.f32.mrf.mxu0
        %1331 = vmatprep.mubr.f32.mxu0 0.0
        %1332 = vmatmul.mubr.f32.gmra.mxu0 %v1222
        %v1333 = vpop.f32.mrf.mxu0
        %v1334 = vadd.f32 0.0, %v1333
        %v1335 = vpop.f32.mrf.mxu0
        %1336 = vmatprep.mubr.f32.mxu0 0.0
        %1337 = vmatmul.mubr.f32.gmra.mxu0 %v1225
        %v1338 = vpop.f32.mrf.mxu0
        %v1339 = vadd.f32 0.0, %v1338
        %v1340 = vpop.f32.mrf.mxu0
        %1341 = vmatprep.mubr.f32.mxu0 0.0
        %1342 = vmatmul.mubr.f32.gmra.mxu0 %v1228
        %v1343 = vpop.f32.mrf.mxu0
        %v1344 = vadd.f32 0.0, %v1343
        %v1345 = vpop.f32.mrf.mxu0
        %1346 = vmatprep.mubr.f32.mxu0 0.0
        %1347 = vmatmul.mubr.f32.gmra.mxu0 %v1231
        %v1348 = vpop.f32.mrf.mxu0
        %v1349 = vadd.f32 0.0, %v1348
        %v1350 = vpop.f32.mrf.mxu0
        %1351 = vmatprep.mubr.f32.mxu0 0.0
        %1352 = vmatmul.mubr.f32.gmra.mxu0 %v1234
        %v1353 = vpop.f32.mrf.mxu0
        %v1354 = vadd.f32 0.0, %v1353
        %v1355 = vpop.f32.mrf.mxu0
        %1356 = vmatprep.mubr.f32.mxu0 0.0
        %1357 = vmatmul.mubr.f32.gmra.mxu0 %v1237
        %v1358 = vpop.f32.mrf.mxu0
        %v1359 = vadd.f32 0.0, %v1358
        %v1360 = vpop.f32.mrf.mxu0
        %1361 = vmatprep.mubr.f32.mxu0 0.0
        %1362 = vmatmul.mubr.f32.gmra.mxu0 %v1240
        %v1363 = vpop.f32.mrf.mxu0
        %v1364 = vadd.f32 0.0, %v1363
        %v1365 = vpop.f32.mrf.mxu0
        %1366 = vdwg.mxu0
        %1368 = vset.pattern.permute.xlu0 0
        %1369 = vperm.xlu0 %1368, %v1309
        %v1370 = vpop.permute.xlu0 %1369
        %1373 = vset.pattern.permute.xlu0 0
        %1374 = vperm.xlu0 %1373, %v1314
        %v1375 = vpop.permute.xlu0 %1374
        %1378 = vset.pattern.permute.xlu0 0
        %1379 = vperm.xlu0 %1378, %v1319
        %v1380 = vpop.permute.xlu0 %1379
        %1383 = vset.pattern.permute.xlu0 0
        %1384 = vperm.xlu0 %1383, %v1324
        %v1385 = vpop.permute.xlu0 %1384
        %1388 = vset.pattern.permute.xlu0 0
        %1389 = vperm.xlu0 %1388, %v1329
        %v1390 = vpop.permute.xlu0 %1389
        %1393 = vset.pattern.permute.xlu0 0
        %1394 = vperm.xlu0 %1393, %v1334
        %v1395 = vpop.permute.xlu0 %1394
        %1398 = vset.pattern.permute.xlu0 0
        %1399 = vperm.xlu0 %1398, %v1339
        %v1400 = vpop.permute.xlu0 %1399
        %1403 = vset.pattern.permute.xlu0 0
        %1404 = vperm.xlu0 %1403, %v1344
        %v1405 = vpop.permute.xlu0 %1404
        %1408 = vset.pattern.permute.xlu0 0
        %1409 = vperm.xlu0 %1408, %v1349
        %v1410 = vpop.permute.xlu0 %1409
        %1413 = vset.pattern.permute.xlu0 0
        %1414 = vperm.xlu0 %1413, %v1354
        %v1415 = vpop.permute.xlu0 %1414
        %1418 = vset.pattern.permute.xlu0 0
        %1419 = vperm.xlu0 %1418, %v1359
        %v1420 = vpop.permute.xlu0 %1419
        %1423 = vset.pattern.permute.xlu0 0
        %1424 = vperm.xlu0 %1423, %v1364
        %v1425 = vpop.permute.xlu0 %1424
        %v1427 = vsub.f32 %v846, %v1370
        %v1428 = vsub.f32 %v848, %v1370
        %v1429 = vsub.f32 %v850, %v1375
        %v1430 = vsub.f32 %v852, %v1375
        %v1431 = vsub.f32 %v856, %v1380
        %v1432 = vsub.f32 %v858, %v1380
        %v1433 = vsub.f32 %v860, %v1385
        %v1434 = vsub.f32 %v862, %v1385
        %v1435 = vsub.f32 %v866, %v1390
        %v1436 = vsub.f32 %v868, %v1390
        %v1437 = vsub.f32 %v870, %v1395
        %v1438 = vsub.f32 %v872, %v1395
        %v1439 = vsub.f32 %v876, %v1400
        %v1440 = vsub.f32 %v878, %v1400
        %v1441 = vsub.f32 %v880, %v1405
        %v1442 = vsub.f32 %v882, %v1405
        %v1443 = vsub.f32 %v886, %v1410
        %v1444 = vsub.f32 %v888, %v1410
        %v1445 = vsub.f32 %v890, %v1415
        %v1446 = vsub.f32 %v892, %v1415
        %v1447 = vsub.f32 %v896, %v1420
        %v1448 = vsub.f32 %v898, %v1420
        %v1449 = vsub.f32 %v900, %v1425
        %v1450 = vsub.f32 %v902, %v1425
        %v1451 = vmul.f32 %v1309, %v513
        %v1452 = vmul.f32 %v1314, %v514
        %v1453 = vmul.f32 %v1319, %v515
        %v1454 = vmul.f32 %v1324, %v516
        %v1455 = vmul.f32 %v1329, %v517
        %v1456 = vmul.f32 %v1334, %v518
        %v1457 = vmul.f32 %v1339, %v519
        %v1458 = vmul.f32 %v1344, %v520
        %v1459 = vmul.f32 %v1349, %v521
        %v1460 = vmul.f32 %v1354, %v522
        %v1461 = vmul.f32 %v1359, %v523
        %v1462 = vmul.f32 %v1364, %v524
        %1464 = vset.pattern.permute.xlu0 1
        %1465 = vperm.xlu0 %1464, %v1451
        %v1466 = vpop.permute.xlu0 %1465
        %1469 = vset.pattern.permute.xlu0 1
        %1470 = vperm.xlu0 %1469, %v1452
        %v1471 = vpop.permute.xlu0 %1470
        %1474 = vset.pattern.permute.xlu0 1
        %1475 = vperm.xlu0 %1474, %v1453
        %v1476 = vpop.permute.xlu0 %1475
        %1479 = vset.pattern.permute.xlu0 1
        %1480 = vperm.xlu0 %1479, %v1454
        %v1481 = vpop.permute.xlu0 %1480
        %1484 = vset.pattern.permute.xlu0 1
        %1485 = vperm.xlu0 %1484, %v1455
        %v1486 = vpop.permute.xlu0 %1485
        %1489 = vset.pattern.permute.xlu0 1
        %1490 = vperm.xlu0 %1489, %v1456
        %v1491 = vpop.permute.xlu0 %1490
        %1494 = vset.pattern.permute.xlu0 1
        %1495 = vperm.xlu0 %1494, %v1457
        %v1496 = vpop.permute.xlu0 %1495
        %1499 = vset.pattern.permute.xlu0 1
        %1500 = vperm.xlu0 %1499, %v1458
        %v1501 = vpop.permute.xlu0 %1500
        %1504 = vset.pattern.permute.xlu0 1
        %1505 = vperm.xlu0 %1504, %v1459
        %v1506 = vpop.permute.xlu0 %1505
        %1509 = vset.pattern.permute.xlu0 1
        %1510 = vperm.xlu0 %1509, %v1460
        %v1511 = vpop.permute.xlu0 %1510
        %1514 = vset.pattern.permute.xlu0 1
        %1515 = vperm.xlu0 %1514, %v1461
        %v1516 = vpop.permute.xlu0 %1515
        %1519 = vset.pattern.permute.xlu0 1
        %1520 = vperm.xlu0 %1519, %v1462
        %v1521 = vpop.permute.xlu0 %1520
        %v1523 = vmul.f32 %v1427, %v1466
        %v1524 = vmul.f32 %v1428, %v1466
        %v1525 = vmul.f32 %v1429, %v1471
        %v1526 = vmul.f32 %v1430, %v1471
        %v1527 = vmul.f32 %v1431, %v1476
        %v1528 = vmul.f32 %v1432, %v1476
        %v1529 = vmul.f32 %v1433, %v1481
        %v1530 = vmul.f32 %v1434, %v1481
        %v1531 = vmul.f32 %v1435, %v1486
        %v1532 = vmul.f32 %v1436, %v1486
        %v1533 = vmul.f32 %v1437, %v1491
        %v1534 = vmul.f32 %v1438, %v1491
        %v1535 = vmul.f32 %v1439, %v1496
        %v1536 = vmul.f32 %v1440, %v1496
        %v1537 = vmul.f32 %v1441, %v1501
        %v1538 = vmul.f32 %v1442, %v1501
        %v1539 = vmul.f32 %v1443, %v1506
        %v1540 = vmul.f32 %v1444, %v1506
        %v1541 = vmul.f32 %v1445, %v1511
        %v1542 = vmul.f32 %v1446, %v1511
        %v1543 = vmul.f32 %v1447, %v1516
        %v1544 = vmul.f32 %v1448, %v1516
        %v1545 = vmul.f32 %v1449, %v1521
        %v1546 = vmul.f32 %v1450, %v1521
        %1547 = vset.pattern.permute.xlu0 2
        %1548 = vperm.xlu0 %1547, %v513
        %v1549 = vpop.permute.xlu0 %1548
        %1551 = vset.pattern.permute.xlu0 2
        %1552 = vperm.xlu0 %1551, %v514
        %v1553 = vpop.permute.xlu0 %1552
        %1555 = vset.pattern.permute.xlu0 2
        %1556 = vperm.xlu0 %1555, %v515
        %v1557 = vpop.permute.xlu0 %1556
        %1559 = vset.pattern.permute.xlu0 2
        %1560 = vperm.xlu0 %1559, %v516
        %v1561 = vpop.permute.xlu0 %1560
        %1563 = vset.pattern.permute.xlu0 2
        %1564 = vperm.xlu0 %1563, %v517
        %v1565 = vpop.permute.xlu0 %1564
        %1567 = vset.pattern.permute.xlu0 2
        %1568 = vperm.xlu0 %1567, %v518
        %v1569 = vpop.permute.xlu0 %1568
        %1571 = vset.pattern.permute.xlu0 2
        %1572 = vperm.xlu0 %1571, %v519
        %v1573 = vpop.permute.xlu0 %1572
        %1575 = vset.pattern.permute.xlu0 2
        %1576 = vperm.xlu0 %1575, %v520
        %v1577 = vpop.permute.xlu0 %1576
        %1579 = vset.pattern.permute.xlu0 2
        %1580 = vperm.xlu0 %1579, %v521
        %v1581 = vpop.permute.xlu0 %1580
        %1583 = vset.pattern.permute.xlu0 2
        %1584 = vperm.xlu0 %1583, %v522
        %v1585 = vpop.permute.xlu0 %1584
        %1587 = vset.pattern.permute.xlu0 2
        %1588 = vperm.xlu0 %1587, %v523
        %v1589 = vpop.permute.xlu0 %1588
        %1591 = vset.pattern.permute.xlu0 2
        %1592 = vperm.xlu0 %1591, %v524
        %v1593 = vpop.permute.xlu0 %1592
        %v1595 = vadd.f32 %v1523, %v1549
        %v1596 = vadd.f32 %v1524, %v1549
        %v1597 = vadd.f32 %v1525, %v1553
        %v1598 = vadd.f32 %v1526, %v1553
        %v1599 = vadd.f32 %v1527, %v1557
        %v1600 = vadd.f32 %v1528, %v1557
        %v1601 = vadd.f32 %v1529, %v1561
        %v1602 = vadd.f32 %v1530, %v1561
        %v1603 = vadd.f32 %v1531, %v1565
        %v1604 = vadd.f32 %v1532, %v1565
        %v1605 = vadd.f32 %v1533, %v1569
        %v1606 = vadd.f32 %v1534, %v1569
        %v1607 = vadd.f32 %v1535, %v1573
        %v1608 = vadd.f32 %v1536, %v1573
        %v1609 = vadd.f32 %v1537, %v1577
        %v1610 = vadd.f32 %v1538, %v1577
        %v1611 = vadd.f32 %v1539, %v1581
        %v1612 = vadd.f32 %v1540, %v1581
        %v1613 = vadd.f32 %v1541, %v1585
        %v1614 = vadd.f32 %v1542, %v1585
        %v1615 = vadd.f32 %v1543, %v1589
        %v1616 = vadd.f32 %v1544, %v1589
        %v1617 = vadd.f32 %v1545, %v1593
        %v1618 = vadd.f32 %v1546, %v1593
        %v1619 = vadd.f32 %v1603, %v1611
        %v1620 = vadd.f32 %v1604, %v1612
        %v1621 = vadd.f32 %v1605, %v1613
        %v1622 = vadd.f32 %v1606, %v1614
        %v1623 = vadd.f32 %v1607, %v1615
        %v1624 = vadd.f32 %v1608, %v1616
        %v1625 = vadd.f32 %v1609, %v1617
        %v1626 = vadd.f32 %v1610, %v1618
        %v1627 = vadd.f32 %v1595, %v1596
        %1628 = vadd.xlane.f32.xlu0 %v1627
        %v1629 = vpop.xlane.xlu0 %1628
        %v1630 = vadd.f32 %v1597, %v1598
        %1631 = vadd.xlane.f32.xlu0 %v1630
        %v1632 = vpop.xlane.xlu0 %1631
        %v1633 = vadd.f32 %v1599, %v1600
        %1634 = vadd.xlane.f32.xlu0 %v1633
        %v1635 = vpop.xlane.xlu0 %1634
        %v1636 = vadd.f32 %v1601, %v1602
        %1637 = vadd.xlane.f32.xlu0 %v1636
        %v1638 = vpop.xlane.xlu0 %1637
        %v1639 = vadd.f32 %v1619, %v1620
        %1640 = vadd.xlane.f32.xlu0 %v1639
        %v1641 = vpop.xlane.xlu0 %1640
        %v1642 = vadd.f32 %v1621, %v1622
        %1643 = vadd.xlane.f32.xlu0 %v1642
        %v1644 = vpop.xlane.xlu0 %1643
        %v1645 = vadd.f32 %v1623, %v1624
        %1646 = vadd.xlane.f32.xlu0 %v1645
        %v1647 = vpop.xlane.xlu0 %1646
        %v1648 = vadd.f32 %v1625, %v1626
        %1649 = vadd.xlane.f32.xlu0 %v1648
        %v1650 = vpop.xlane.xlu0 %1649
        %v1651 = vmul.f32 %v1629, 0.00390625
        %v1652 = vmul.f32 %v1632, 0.00390625
        %v1653 = vmul.f32 %v1635, 0.00390625
        %v1654 = vmul.f32 %v1638, 0.00390625
        %v1655 = vmul.f32 %v1641, 0.00390625
        %v1656 = vmul.f32 %v1644, 0.00390625
        %v1657 = vmul.f32 %v1647, 0.00390625
        %v1658 = vmul.f32 %v1650, 0.00390625
        %vm1667 = vcmask 1041408
        %v1668 = vrot.slane %v1651, 6
        %v1669 = vrot.slane %v1652, 6
        %v1670 = vsel %vm1667, %v1668, %v1669
        %v1671 = vrot.slane %v1653, 6
        %v1672 = vsel %vm1667, %v1669, %v1671
        %v1673 = vrot.slane %v1654, 6
        %v1674 = vsel %vm1667, %v1671, %v1673
        %v1675 = vrot.slane %v1655, 6
        %v1676 = vsel %vm1667, %v1673, %v1675
        %v1677 = vrot.slane %v1656, 6
        %v1678 = vsel %vm1667, %v1675, %v1677
        %v1679 = vrot.slane %v1657, 6
        %v1680 = vsel %vm1667, %v1677, %v1679
        %v1681 = vrot.slane %v1658, 6
        %v1682 = vsel %vm1667, %v1679, %v1681
        %v1685 = vsel %vm1667, 0.0, %v1668
        %v1686 = vsel %vm1667, %v1681, 0.0
        %v1687 = vld [vmem:[%s2] sm:$0xff]
        %v1688 = vld [vmem:[%s2 + $0x8] sm:$0xff]
        %v1689 = vld [vmem:[%s2 + $0x10] sm:$0xff]
        %v1690 = vld [vmem:[%s2 + $0x18] sm:$0xff]
        %v1691 = vld [vmem:[%s2 + $0x20] sm:$0xff]
        %v1692 = vld [vmem:[%s2 + $0x28] sm:$0xff]
        %v1693 = vld [vmem:[%s2 + $0x30] sm:$0xff]
        %v1694 = vld [vmem:[%s2 + $0x38] sm:$0xff]
        %1696 = vrot.lane.b32.xlu0 %v1685, 3
        %v1697 = vpop.permute.xlu0 %1696
        %1698 = vrot.lane.b32.xlu0 %v1670, 3
        %v1699 = vpop.permute.xlu0 %1698
        %1700 = vrot.lane.b32.xlu0 %v1672, 3
        %v1701 = vpop.permute.xlu0 %1700
        %1702 = vrot.lane.b32.xlu0 %v1674, 3
        %v1703 = vpop.permute.xlu0 %1702
        %1704 = vrot.lane.b32.xlu0 %v1676, 3
        %v1705 = vpop.permute.xlu0 %1704
        %1706 = vrot.lane.b32.xlu0 %v1678, 3
        %v1707 = vpop.permute.xlu0 %1706
        %1708 = vrot.lane.b32.xlu0 %v1680, 3
        %v1709 = vpop.permute.xlu0 %1708
        %1710 = vrot.lane.b32.xlu0 %v1682, 3
        %v1711 = vpop.permute.xlu0 %1710
        %v1720 = vmul.f32 %v1687, %v1697
        %v1721 = vmul.f32 %v1688, %v1699
        %v1722 = vmul.f32 %v1689, %v1701
        %v1723 = vmul.f32 %v1690, %v1703
        %v1724 = vmul.f32 %v1691, %v1705
        %v1725 = vmul.f32 %v1692, %v1707
        %v1726 = vmul.f32 %v1693, %v1709
        %v1727 = vmul.f32 %v1694, %v1711
        %v1728 = vadd.f32 %v1720, 0.0
        %v1729 = vadd.f32 %v1721, 0.0
        %v1730 = vadd.f32 %v1722, 0.0
        %v1731 = vadd.f32 %v1723, 0.0
        %v1732 = vadd.f32 %v1724, 0.0
        %v1733 = vadd.f32 %v1725, 0.0
        %v1734 = vadd.f32 %v1726, 0.0
        %v1735 = vadd.f32 %v1727, 0.0
        %vm1737 = vcmask 1046528
        %v1738 = vrot.slane %v1685, 1
        %v1739 = vrot.slane %v1670, 1
        %v1740 = vsel %vm1737, %v1738, %v1739
        %v1741 = vrot.slane %v1672, 1
        %v1742 = vsel %vm1737, %v1739, %v1741
        %v1743 = vrot.slane %v1674, 1
        %v1744 = vsel %vm1737, %v1741, %v1743
        %v1745 = vrot.slane %v1676, 1
        %v1746 = vsel %vm1737, %v1743, %v1745
        %v1747 = vrot.slane %v1678, 1
        %v1748 = vsel %vm1737, %v1745, %v1747
        %v1749 = vrot.slane %v1680, 1
        %v1750 = vsel %vm1737, %v1747, %v1749
        %v1751 = vrot.slane %v1682, 1
        %v1752 = vsel %vm1737, %v1749, %v1751
        %v1753 = vrot.slane %v1686, 1
        %v1754 = vsel %vm1737, %v1751, %v1753
        %1755 = vrot.lane.b32.xlu0 %v1740, 4
        %v1756 = vpop.permute.xlu0 %1755
        %1757 = vrot.lane.b32.xlu0 %v1742, 4
        %v1758 = vpop.permute.xlu0 %1757
        %1759 = vrot.lane.b32.xlu0 %v1744, 4
        %v1760 = vpop.permute.xlu0 %1759
        %1761 = vrot.lane.b32.xlu0 %v1746, 4
        %v1762 = vpop.permute.xlu0 %1761
        %1763 = vrot.lane.b32.xlu0 %v1748, 4
        %v1764 = vpop.permute.xlu0 %1763
        %1765 = vrot.lane.b32.xlu0 %v1750, 4
        %v1766 = vpop.permute.xlu0 %1765
        %1767 = vrot.lane.b32.xlu0 %v1752, 4
        %v1768 = vpop.permute.xlu0 %1767
        %1769 = vrot.lane.b32.xlu0 %v1754, 4
        %v1770 = vpop.permute.xlu0 %1769
        %v1779 = vmul.f32 %v1687, %v1756
        %v1780 = vmul.f32 %v1688, %v1758
        %v1781 = vmul.f32 %v1689, %v1760
        %v1782 = vmul.f32 %v1690, %v1762
        %v1783 = vmul.f32 %v1691, %v1764
        %v1784 = vmul.f32 %v1692, %v1766
        %v1785 = vmul.f32 %v1693, %v1768
        %v1786 = vmul.f32 %v1694, %v1770
        %1795 = vrot.lane.b32.xlu0 %v1779, 127
        %v1796 = vpop.permute.xlu0 %1795
        %1797 = vrot.lane.b32.xlu0 %v1780, 127
        %v1798 = vpop.permute.xlu0 %1797
        %1799 = vrot.lane.b32.xlu0 %v1781, 127
        %v1800 = vpop.permute.xlu0 %1799
        %1801 = vrot.lane.b32.xlu0 %v1782, 127
        %v1802 = vpop.permute.xlu0 %1801
        %1803 = vrot.lane.b32.xlu0 %v1783, 127
        %v1804 = vpop.permute.xlu0 %1803
        %1805 = vrot.lane.b32.xlu0 %v1784, 127
        %v1806 = vpop.permute.xlu0 %1805
        %1807 = vrot.lane.b32.xlu0 %v1785, 127
        %v1808 = vpop.permute.xlu0 %1807
        %1809 = vrot.lane.b32.xlu0 %v1786, 127
        %v1810 = vpop.permute.xlu0 %1809
        %v1819 = vadd.f32 %v1728, %v1796
        %v1820 = vadd.f32 %v1729, %v1798
        %v1821 = vadd.f32 %v1730, %v1800
        %v1822 = vadd.f32 %v1731, %v1802
        %v1823 = vadd.f32 %v1732, %v1804
        %v1824 = vadd.f32 %v1733, %v1806
        %v1825 = vadd.f32 %v1734, %v1808
        %v1826 = vadd.f32 %v1735, %v1810
        %vm1827 = vcmask 1045504
        %v1828 = vrot.slane %v1685, 2
        %v1829 = vrot.slane %v1670, 2
        %v1830 = vsel %vm1827, %v1828, %v1829
        %v1831 = vrot.slane %v1672, 2
        %v1832 = vsel %vm1827, %v1829, %v1831
        %v1833 = vrot.slane %v1674, 2
        %v1834 = vsel %vm1827, %v1831, %v1833
        %v1835 = vrot.slane %v1676, 2
        %v1836 = vsel %vm1827, %v1833, %v1835
        %v1837 = vrot.slane %v1678, 2
        %v1838 = vsel %vm1827, %v1835, %v1837
        %v1839 = vrot.slane %v1680, 2
        %v1840 = vsel %vm1827, %v1837, %v1839
        %v1841 = vrot.slane %v1682, 2
        %v1842 = vsel %vm1827, %v1839, %v1841
        %v1843 = vrot.slane %v1686, 2
        %v1844 = vsel %vm1827, %v1841, %v1843
        %1845 = vrot.lane.b32.xlu0 %v1830, 5
        %v1846 = vpop.permute.xlu0 %1845
        %1847 = vrot.lane.b32.xlu0 %v1832, 5
        %v1848 = vpop.permute.xlu0 %1847
        %1849 = vrot.lane.b32.xlu0 %v1834, 5
        %v1850 = vpop.permute.xlu0 %1849
        %1851 = vrot.lane.b32.xlu0 %v1836, 5
        %v1852 = vpop.permute.xlu0 %1851
        %1853 = vrot.lane.b32.xlu0 %v1838, 5
        %v1854 = vpop.permute.xlu0 %1853
        %1855 = vrot.lane.b32.xlu0 %v1840, 5
        %v1856 = vpop.permute.xlu0 %1855
        %1857 = vrot.lane.b32.xlu0 %v1842, 5
        %v1858 = vpop.permute.xlu0 %1857
        %1859 = vrot.lane.b32.xlu0 %v1844, 5
        %v1860 = vpop.permute.xlu0 %1859
        %v1869 = vmul.f32 %v1687, %v1846
        %v1870 = vmul.f32 %v1688, %v1848
        %v1871 = vmul.f32 %v1689, %v1850
        %v1872 = vmul.f32 %v1690, %v1852
        %v1873 = vmul.f32 %v1691, %v1854
        %v1874 = vmul.f32 %v1692, %v1856
        %v1875 = vmul.f32 %v1693, %v1858
        %v1876 = vmul.f32 %v1694, %v1860
        %1885 = vrot.lane.b32.xlu0 %v1869, 126
        %v1886 = vpop.permute.xlu0 %1885
        %1887 = vrot.lane.b32.xlu0 %v1870, 126
        %v1888 = vpop.permute.xlu0 %1887
        %1889 = vrot.lane.b32.xlu0 %v1871, 126
        %v1890 = vpop.permute.xlu0 %1889
        %1891 = vrot.lane.b32.xlu0 %v1872, 126
        %v1892 = vpop.permute.xlu0 %1891
        %1893 = vrot.lane.b32.xlu0 %v1873, 126
        %v1894 = vpop.permute.xlu0 %1893
        %1895 = vrot.lane.b32.xlu0 %v1874, 126
        %v1896 = vpop.permute.xlu0 %1895
        %1897 = vrot.lane.b32.xlu0 %v1875, 126
        %v1898 = vpop.permute.xlu0 %1897
        %1899 = vrot.lane.b32.xlu0 %v1876, 126
        %v1900 = vpop.permute.xlu0 %1899
        %v1909 = vadd.f32 %v1819, %v1886
        %v1910 = vadd.f32 %v1820, %v1888
        %v1911 = vadd.f32 %v1821, %v1890
        %v1912 = vadd.f32 %v1822, %v1892
        %v1913 = vadd.f32 %v1823, %v1894
        %v1914 = vadd.f32 %v1824, %v1896
        %v1915 = vadd.f32 %v1825, %v1898
        %v1916 = vadd.f32 %v1826, %v1900
        %vm1917 = vcmask 1044480
        %v1918 = vrot.slane %v1685, 3
        %v1919 = vrot.slane %v1670, 3
        %v1920 = vsel %vm1917, %v1918, %v1919
        %v1921 = vrot.slane %v1672, 3
        %v1922 = vsel %vm1917, %v1919, %v1921
        %v1923 = vrot.slane %v1674, 3
        %v1924 = vsel %vm1917, %v1921, %v1923
        %v1925 = vrot.slane %v1676, 3
        %v1926 = vsel %vm1917, %v1923, %v1925
        %v1927 = vrot.slane %v1678, 3
        %v1928 = vsel %vm1917, %v1925, %v1927
        %v1929 = vrot.slane %v1680, 3
        %v1930 = vsel %vm1917, %v1927, %v1929
        %v1931 = vrot.slane %v1682, 3
        %v1932 = vsel %vm1917, %v1929, %v1931
        %v1933 = vrot.slane %v1686, 3
        %v1934 = vsel %vm1917, %v1931, %v1933
        %1935 = vrot.lane.b32.xlu0 %v1920, 6
        %v1936 = vpop.permute.xlu0 %1935
        %1937 = vrot.lane.b32.xlu0 %v1922, 6
        %v1938 = vpop.permute.xlu0 %1937
        %1939 = vrot.lane.b32.xlu0 %v1924, 6
        %v1940 = vpop.permute.xlu0 %1939
        %1941 = vrot.lane.b32.xlu0 %v1926, 6
        %v1942 = vpop.permute.xlu0 %1941
        %1943 = vrot.lane.b32.xlu0 %v1928, 6
        %v1944 = vpop.permute.xlu0 %1943
        %1945 = vrot.lane.b32.xlu0 %v1930, 6
        %v1946 = vpop.permute.xlu0 %1945
        %1947 = vrot.lane.b32.xlu0 %v1932, 6
        %v1948 = vpop.permute.xlu0 %1947
        %1949 = vrot.lane.b32.xlu0 %v1934, 6
        %v1950 = vpop.permute.xlu0 %1949
        %v1959 = vmul.f32 %v1687, %v1936
        %v1960 = vmul.f32 %v1688, %v1938
        %v1961 = vmul.f32 %v1689, %v1940
        %v1962 = vmul.f32 %v1690, %v1942
        %v1963 = vmul.f32 %v1691, %v1944
        %v1964 = vmul.f32 %v1692, %v1946
        %v1965 = vmul.f32 %v1693, %v1948
        %v1966 = vmul.f32 %v1694, %v1950
        %1975 = vrot.lane.b32.xlu0 %v1959, 125
        %v1976 = vpop.permute.xlu0 %1975
        %1977 = vrot.lane.b32.xlu0 %v1960, 125
        %v1978 = vpop.permute.xlu0 %1977
        %1979 = vrot.lane.b32.xlu0 %v1961, 125
        %v1980 = vpop.permute.xlu0 %1979
        %1981 = vrot.lane.b32.xlu0 %v1962, 125
        %v1982 = vpop.permute.xlu0 %1981
        %1983 = vrot.lane.b32.xlu0 %v1963, 125
        %v1984 = vpop.permute.xlu0 %1983
        %1985 = vrot.lane.b32.xlu0 %v1964, 125
        %v1986 = vpop.permute.xlu0 %1985
        %1987 = vrot.lane.b32.xlu0 %v1965, 125
        %v1988 = vpop.permute.xlu0 %1987
        %1989 = vrot.lane.b32.xlu0 %v1966, 125
        %v1990 = vpop.permute.xlu0 %1989
        %v1999 = vadd.f32 %v1909, %v1976
        %v2000 = vadd.f32 %v1910, %v1978
        %v2001 = vadd.f32 %v1911, %v1980
        %v2002 = vadd.f32 %v1912, %v1982
        %v2003 = vadd.f32 %v1913, %v1984
        %v2004 = vadd.f32 %v1914, %v1986
        %v2005 = vadd.f32 %v1915, %v1988
        %v2006 = vadd.f32 %v1916, %v1990
        %vm2007 = vcmask 1043456
        %v2008 = vrot.slane %v1685, 4
        %v2009 = vrot.slane %v1670, 4
        %v2010 = vsel %vm2007, %v2008, %v2009
        %v2011 = vrot.slane %v1672, 4
        %v2012 = vsel %vm2007, %v2009, %v2011
        %v2013 = vrot.slane %v1674, 4
        %v2014 = vsel %vm2007, %v2011, %v2013
        %v2015 = vrot.slane %v1676, 4
        %v2016 = vsel %vm2007, %v2013, %v2015
        %v2017 = vrot.slane %v1678, 4
        %v2018 = vsel %vm2007, %v2015, %v2017
        %v2019 = vrot.slane %v1680, 4
        %v2020 = vsel %vm2007, %v2017, %v2019
        %v2021 = vrot.slane %v1682, 4
        %v2022 = vsel %vm2007, %v2019, %v2021
        %v2023 = vrot.slane %v1686, 4
        %v2024 = vsel %vm2007, %v2021, %v2023
        %2025 = vrot.lane.b32.xlu0 %v2010, 7
        %v2026 = vpop.permute.xlu0 %2025
        %2027 = vrot.lane.b32.xlu0 %v2012, 7
        %v2028 = vpop.permute.xlu0 %2027
        %2029 = vrot.lane.b32.xlu0 %v2014, 7
        %v2030 = vpop.permute.xlu0 %2029
        %2031 = vrot.lane.b32.xlu0 %v2016, 7
        %v2032 = vpop.permute.xlu0 %2031
        %2033 = vrot.lane.b32.xlu0 %v2018, 7
        %v2034 = vpop.permute.xlu0 %2033
        %2035 = vrot.lane.b32.xlu0 %v2020, 7
        %v2036 = vpop.permute.xlu0 %2035
        %2037 = vrot.lane.b32.xlu0 %v2022, 7
        %v2038 = vpop.permute.xlu0 %2037
        %2039 = vrot.lane.b32.xlu0 %v2024, 7
        %v2040 = vpop.permute.xlu0 %2039
        %v2049 = vmul.f32 %v1687, %v2026
        %v2050 = vmul.f32 %v1688, %v2028
        %v2051 = vmul.f32 %v1689, %v2030
        %v2052 = vmul.f32 %v1690, %v2032
        %v2053 = vmul.f32 %v1691, %v2034
        %v2054 = vmul.f32 %v1692, %v2036
        %v2055 = vmul.f32 %v1693, %v2038
        %v2056 = vmul.f32 %v1694, %v2040
        %2065 = vrot.lane.b32.xlu0 %v2049, 124
        %v2066 = vpop.permute.xlu0 %2065
        %2067 = vrot.lane.b32.xlu0 %v2050, 124
        %v2068 = vpop.permute.xlu0 %2067
        %2069 = vrot.lane.b32.xlu0 %v2051, 124
        %v2070 = vpop.permute.xlu0 %2069
        %2071 = vrot.lane.b32.xlu0 %v2052, 124
        %v2072 = vpop.permute.xlu0 %2071
        %2073 = vrot.lane.b32.xlu0 %v2053, 124
        %v2074 = vpop.permute.xlu0 %2073
        %2075 = vrot.lane.b32.xlu0 %v2054, 124
        %v2076 = vpop.permute.xlu0 %2075
        %2077 = vrot.lane.b32.xlu0 %v2055, 124
        %v2078 = vpop.permute.xlu0 %2077
        %2079 = vrot.lane.b32.xlu0 %v2056, 124
        %v2080 = vpop.permute.xlu0 %2079
        %v2089 = vadd.f32 %v1999, %v2066
        %v2090 = vadd.f32 %v2000, %v2068
        %v2091 = vadd.f32 %v2001, %v2070
        %v2092 = vadd.f32 %v2002, %v2072
        %v2093 = vadd.f32 %v2003, %v2074
        %v2094 = vadd.f32 %v2004, %v2076
        %v2095 = vadd.f32 %v2005, %v2078
        %v2096 = vadd.f32 %v2006, %v2080
        %v2097 = vsub.f32 0.0, %v2089
        %v2098 = vsub.f32 0.0, %v2090
        %v2099 = vsub.f32 0.0, %v2091
        %v2100 = vsub.f32 0.0, %v2092
        %v2101 = vsub.f32 0.0, %v2093
        %v2102 = vsub.f32 0.0, %v2094
        %v2103 = vsub.f32 0.0, %v2095
        %v2104 = vsub.f32 0.0, %v2096
        %v2105 = vmul.f32 %v2097, 1.442695
        %v2106 = vpow.pop %v2105
        %v2107 = vmul.f32 %v2098, 1.442695
        %v2108 = vpow.pop %v2107
        %v2109 = vmul.f32 %v2099, 1.442695
        %v2110 = vpow.pop %v2109
        %v2111 = vmul.f32 %v2100, 1.442695
        %v2112 = vpow.pop %v2111
        %v2113 = vmul.f32 %v2101, 1.442695
        %v2114 = vpow.pop %v2113
        %v2115 = vmul.f32 %v2102, 1.442695
        %v2116 = vpow.pop %v2115
        %v2117 = vmul.f32 %v2103, 1.442695
        %v2118 = vpow.pop %v2117
        %v2119 = vmul.f32 %v2104, 1.442695
        %v2120 = vpow.pop %v2119
        %v2121 = vadd.f32 %v2106, 1.0
        %v2122 = vadd.f32 %v2108, 1.0
        %v2123 = vadd.f32 %v2110, 1.0
        %v2124 = vadd.f32 %v2112, 1.0
        %v2125 = vadd.f32 %v2114, 1.0
        %v2126 = vadd.f32 %v2116, 1.0
        %v2127 = vadd.f32 %v2118, 1.0
        %v2128 = vadd.f32 %v2120, 1.0
        %v2129 = vrcp.pop %v2121
        %v2130 = vmul.f32 1.0, %v2129
        %v2131 = vrcp.pop %v2122
        %v2132 = vmul.f32 1.0, %v2131
        %v2133 = vrcp.pop %v2123
        %v2134 = vmul.f32 1.0, %v2133
        %v2135 = vrcp.pop %v2124
        %v2136 = vmul.f32 1.0, %v2135
        %v2137 = vrcp.pop %v2125
        %v2138 = vmul.f32 1.0, %v2137
        %v2139 = vrcp.pop %v2126
        %v2140 = vmul.f32 1.0, %v2139
        %v2141 = vrcp.pop %v2127
        %v2142 = vmul.f32 1.0, %v2141
        %v2143 = vrcp.pop %v2128
        %v2144 = vmul.f32 1.0, %v2143
        %2146 = vset.pattern.permute.xlu0 3
        %2147 = vperm.xlu0 %2146, %v2130
        %v2148 = vpop.permute.xlu0 %2147
        %2151 = vset.pattern.permute.xlu0 3
        %2152 = vperm.xlu0 %2151, %v2132
        %v2153 = vpop.permute.xlu0 %2152
        %2156 = vset.pattern.permute.xlu0 3
        %2157 = vperm.xlu0 %2156, %v2134
        %v2158 = vpop.permute.xlu0 %2157
        %2161 = vset.pattern.permute.xlu0 3
        %2162 = vperm.xlu0 %2161, %v2136
        %v2163 = vpop.permute.xlu0 %2162
        %2166 = vset.pattern.permute.xlu0 3
        %2167 = vperm.xlu0 %2166, %v2138
        %v2168 = vpop.permute.xlu0 %2167
        %2171 = vset.pattern.permute.xlu0 3
        %2172 = vperm.xlu0 %2171, %v2140
        %v2173 = vpop.permute.xlu0 %2172
        %2176 = vset.pattern.permute.xlu0 3
        %2177 = vperm.xlu0 %2176, %v2142
        %v2178 = vpop.permute.xlu0 %2177
        %2181 = vset.pattern.permute.xlu0 3
        %2182 = vperm.xlu0 %2181, %v2144
        %v2183 = vpop.permute.xlu0 %2182
        %v2185 = vmul.f32 %v1595, %v2148
        %v2186 = vmul.f32 %v1596, %v2148
        %v2187 = vmul.f32 %v1597, %v2153
        %v2188 = vmul.f32 %v1598, %v2153
        %v2189 = vmul.f32 %v1599, %v2158
        %v2190 = vmul.f32 %v1600, %v2158
        %v2191 = vmul.f32 %v1601, %v2163
        %v2192 = vmul.f32 %v1602, %v2163
        %v2193 = vmul.f32 %v1619, %v2168
        %v2194 = vmul.f32 %v1620, %v2168
        %v2195 = vmul.f32 %v1621, %v2173
        %v2196 = vmul.f32 %v1622, %v2173
        %v2197 = vmul.f32 %v1623, %v2178
        %v2198 = vmul.f32 %v1624, %v2178
        %v2199 = vmul.f32 %v1625, %v2183
        %v2200 = vmul.f32 %v1626, %v2183
        %2201 = vst [vmem:[%s243] sm:$0xff] %v2185
        %2202 = vst [vmem:[%s243 + $0x8] sm:$0xff] %v2186
        %2203 = vst [vmem:[%s243 + $0x10] sm:$0xff] %v2187
        %2204 = vst [vmem:[%s243 + $0x18] sm:$0xff] %v2188
        %2205 = vst [vmem:[%s243 + $0x20] sm:$0xff] %v2189
        %2206 = vst [vmem:[%s243 + $0x28] sm:$0xff] %v2190
        %2207 = vst [vmem:[%s243 + $0x30] sm:$0xff] %v2191
        %2208 = vst [vmem:[%s243 + $0x38] sm:$0xff] %v2192
        %2209 = vst [vmem:[%s243 + $0x40] sm:$0xff] %v2193
        %2210 = vst [vmem:[%s243 + $0x48] sm:$0xff] %v2194
        %2211 = vst [vmem:[%s243 + $0x50] sm:$0xff] %v2195
        %2212 = vst [vmem:[%s243 + $0x58] sm:$0xff] %v2196
        %2213 = vst [vmem:[%s243 + $0x60] sm:$0xff] %v2197
        %2214 = vst [vmem:[%s243 + $0x68] sm:$0xff] %v2198
        %2215 = vst [vmem:[%s243 + $0x70] sm:$0xff] %v2199
        %2216 = vst [vmem:[%s243 + $0x78] sm:$0xff] %v2200
        %s2217 = sand.u32 %s140, 1
        %s2218 = scalar_lea.sflag [#allocation4], %s2217
        %s2219 = sand.u32 %s140, 1
        %s2220 = smul.addr %s2219, 128
        %s2221 = scalar_lea.vmem [#allocation5], %s2220
        // Predicated region
        $region45: #{tpu_custom_call.1} parent=39 // pred_check
          %p2222 = pneg %p150
        $region46: #{tpu_custom_call.1} parent=39 // pred_check_branch
          %2224 = sbr.rel (%p2222) target = $region48
        $region47: #{tpu_custom_call.1} parent=39 // pred_region
          %s2225 = smul.u32 8, %s22
          %s2227 = ssub.s32 2048, 2048
          %2228 = vsyncadd %s2218, %s2227
          %s2229 = smul.addr %s2225, 2
          %s2230 = smul.addr %s2229, 128
          %s2231 = scalar_lea.hbm %s5, %s2230
          %s2232 = sshll.u32 %s2221, 4
          %s2233 = int_to_ptr.vmem [resolvable:$true] %s2232
          %2238 = dma.vmem_to_hbm [thread:$0]  %s2233, 2048, %s2231, %s2218, 256, 256, 16
        $region48: #{tpu_custom_call.1} parent=39 // pred_fallthru
          _
      $region40: #{tpu_custom_call.1} parent=5 // pred_fallthru
        _
      %p2239 = scmp.le.s32.totalorder 2, %s17
      // Predicated region
      $region49: #{tpu_custom_call.1} parent=5 // pred_check
        %p2240 = pneg %p2239
      $region50: #{tpu_custom_call.1} parent=5 // pred_check_branch
        %2242 = sbr.rel (%p2240) target = $region52
      $region51: #{tpu_custom_call.1} parent=5 // pred_region
        %s2243 = ssub.s32 %s17, 2
        // Predicated region
        $region53: #{tpu_custom_call.1} parent=51 // pred_check
          %p2244 = pneg %p156
        $region54: #{tpu_custom_call.1} parent=51 // pred_check_branch
          %2246 = sbr.rel (%p2244) target = $region56
        $region55: #{tpu_custom_call.1} parent=51 // pred_region
          %s2247 = sand.u32 %s141, 1
          %s2248 = scalar_lea.sflag [#allocation4], %s2247
          %s2249 = sand.u32 %s141, 1
          %s2250 = smul.addr %s2249, 128
          %s2251 = scalar_lea.vmem [#allocation5], %s2250
          %2252 = dma.done %s2248, 2048
        $region56: #{tpu_custom_call.1} parent=51 // pred_fallthru
          _
      $region52: #{tpu_custom_call.1} parent=5 // pred_fallthru
        _
    $region6: #{tpu_custom_call.1} parent=1 // loop_footer
      %s21 = sadd.s32 1, %s17
    $region7: #{tpu_custom_call.1} parent=1 // loop_footer_branch
      %16 = sbr.rel target = $region3
    $region8: #{tpu_custom_call.1} parent=1 // loop_exit
      _
    %2253 = vsyncpa [#allocation3], 1
    %s2254 = scalar_lea.sflag [#allocation3], 1
    %2255 = vsyncpa %s2254, 1
    %2256 = vsyncpa [#allocation4], 1
    %s2257 = scalar_lea.sflag [#allocation4], 1
    %2258 = vsyncpa %s2257, 1

</llo_original>
